<compile_context>
chip_gen: v7x
topology: tpu7x:2x2x1
jax: 0.10.0
libtpu: 0.0.40
codegen_flags: <defaults>
</compile_context>

<pallas_src>
import functools
import math

import jax
import jax.numpy as jnp
from jax import lax
from jax.experimental import pallas as pl
from jax.experimental.pallas import tpu as pltpu

_LOG512 = math.log(512.0)
_MASK_NEG = -1e12


def gau_kernel(hf_ref, mask_ref, wu_ref, bu_ref, wvqk_ref, bvqk_ref,
               gamma_ref, beta_ref, wo_ref, bo_ref,
               o_ref, k_scr, v_scr, q_scr, bias_scr,
               *, intermediate_size, key_size, attention_scale):
    # Shapes seen by the kernel (batch dim squeezed by the BlockSpecs):
    #   hf_ref   : (L, H)      full (padded) sequence, resident across qi
    #   mask_ref : (1, L)
    #   wu_ref   : (H, E)      bu_ref   : (1, E)
    #   wvqk_ref : (H, E+S)    bvqk_ref : (1, E+S)    fused [v | qk] slab
    #   gamma_ref: (2, S)      beta_ref : (2, S)
    #   wo_ref   : (E, H)      bo_ref   : (1, H)
    #   o_ref    : (TQ, H)
    #   k_scr    : (L, S)   v_scr : (L, E)   q_scr : (L, S)   bias_scr : (1, L)
    E = intermediate_size
    S = key_size
    qi = pl.program_id(1)
    TQ = o_ref.shape[0]
    dot_dt = hf_ref.dtype            # MXU operand dtype (bf16 fast path)

    # ---- once per batch element: mask bias, scale, and k / v / scaled-q caches ----
    @pl.when(qi == 0)
    def _():
        m = mask_ref[...].astype(jnp.float32)                        # (1, L)
        bias_scr[...] = (1.0 - m) * jnp.float32(_MASK_NEG)
        # softmax_plus length from the key mask (O(L), not O(L^2))
        l = jnp.maximum(jnp.sum(m, axis=-1, keepdims=True), 1.0)     # (1, 1)
        scale = jnp.log(l) * (1.0 / _LOG512)
        if attention_scale:
            scale = scale * (1.0 / math.sqrt(S))

        h_all = hf_ref[...]                                          # (L, H)
        # single fused projection for v and qk (one full-width MXU pass)
        x = jnp.dot(h_all, wvqk_ref[...], preferred_element_type=jnp.float32)
        x = x + bvqk_ref[...].astype(jnp.float32)
        x = x * jax.nn.sigmoid(x)                                    # silu / swish
        xv = x[:, :E]                                                # (L, E)
        xqk = x[:, E:]                                               # (L, S)

        gamma = gamma_ref[...].astype(jnp.float32)
        beta = beta_ref[...].astype(jnp.float32)
        v_scr[...] = xv.astype(v_scr.dtype)
        k_scr[...] = (xqk * gamma[1:2, :] + beta[1:2, :]).astype(k_scr.dtype)
        # OffsetScale head 0 with the softmax_plus / attention scale folded in
        q_scr[...] = ((xqk * gamma[0:1, :] + beta[0:1, :]) * scale).astype(q_scr.dtype)

    # ---- per query tile ----
    row = pl.multiple_of(qi * TQ, TQ)
    hq = hf_ref[pl.ds(row, TQ), :]                                   # slice of resident block
    xu = jnp.dot(hq, wu_ref[...], preferred_element_type=jnp.float32)
    xu = xu + bu_ref[...].astype(jnp.float32)
    u = xu * jax.nn.sigmoid(xu)                                      # (TQ, E)

    q = q_scr[pl.ds(row, TQ), :]                                     # (TQ, S), pre-scaled
    # scores = q @ k^T, contracting on the feature dim (no k transpose relayout)
    scores = lax.dot_general(
        q, k_scr[...],
        dimension_numbers=(((1,), (1,)), ((), ())),
        preferred_element_type=jnp.float32)                          # (TQ, L)
    scores = scores + bias_scr[...]                                  # additive key mask

    # stable softmax
    scores = scores - jnp.max(scores, axis=-1, keepdims=True)
    p = jnp.exp(scores)
    denom = jnp.sum(p, axis=-1, keepdims=True)
    p = p * pl.reciprocal(denom, approx=True)

    # gated output: o_dense(u * (p @ v))
    ctx = jnp.dot(p.astype(dot_dt), v_scr[...],
                  preferred_element_type=jnp.float32)                # (TQ, E)
    gated = u * ctx
    out = jnp.dot(gated.astype(dot_dt), wo_ref[...],
                  preferred_element_type=jnp.float32)
    out = out + bo_ref[...].astype(jnp.float32)
    o_ref[...] = out.astype(o_ref.dtype)


def gated_attention_unit(hidden_states, attention_mask, params, *,
                         intermediate_size, attention_key_size,
                         attention_scale=True, query_tile=256,
                         single_buffer_weights=True):
    B, L, H = hidden_states.shape
    E, S = intermediate_size, attention_key_size
    dtype = hidden_states.dtype
    isz = jnp.dtype(dtype).itemsize

    # --- generation-aware VMEM budget (v5e/v6e: 128 MiB, v7x: 64 MiB physical) ---
    try:
        vmem_cap = int(pltpu.get_tpu_info().vmem_capacity_bytes)
    except Exception:
        vmem_cap = 64 * 1024 * 1024
    vmem_budget = int(vmem_cap * 0.85)           # ~15% headroom for Mosaic scratch

    def estimate(tq, lpad):
        wbufs = 1 if single_buffer_weights else 2
        weights = (H * E + E + H * (E + S) + (E + S) + 4 * S + E * H + H) * isz
        seq = 2 * lpad * H * isz + 2 * 4 * lpad              # hidden + mask blocks
        outb = 2 * tq * H * isz
        scratch = lpad * (2 * S + E) * isz + 4 * lpad        # k, q, v + mask bias
        work = lpad * (E + S) * 4                            # fused f32 projection temp
        work += 4 * tq * lpad * 4                            # score temporaries
        work += 4 * tq * (E + S) * 4                         # u / ctx / gated temps
        return wbufs * weights + seq + outb + scratch + work

    # --- query tiling: pad L up to a multiple of TQ (never an (L, L) score tensor) ---
    TQ = min(query_tile, L)
    L_pad = L if L % TQ == 0 else int(pl.cdiv(L, TQ)) * TQ
    # Long-sequence fallback: shrink the query tile until the working set fits.
    while TQ > 128 and TQ % 16 == 0 and estimate(TQ, L_pad) > vmem_budget:
        TQ //= 2
        L_pad = int(pl.cdiv(L, TQ)) * TQ
    nq = L_pad // TQ
    vmem_limit = int(min(max(estimate(TQ, L_pad), 32 * 1024 * 1024), vmem_budget))

    if L_pad != L:
        pad = L_pad - L
        hidden_states = jnp.pad(hidden_states, ((0, 0), (0, pad), (0, 0)))
        attention_mask = jnp.pad(attention_mask, ((0, 0), (0, 0), (0, 0), (0, pad)))

    # --- split i_dense into a u slab and a fused [v | qk] slab (lane-aligned when
    #     E % 128 == 0), so the qi==0 projection is a single full-width matmul ---
    wi, bi = params["wi"], params["bi"]
    wu, bu = wi[:, :E], bi[:, :E]
    wvqk, bvqk = wi[:, E:], bi[:, E:]
    gamma, beta = params["gamma"], params["beta"]
    wo, bo = params["wo"], params["bo"]

    kernel = functools.partial(gau_kernel, intermediate_size=E, key_size=S,
                               attention_scale=attention_scale)

    def build_and_run(weight_buffers):
        def const(shape):
            idx = lambda b, qi: (0,) * len(shape)
            if weight_buffers is None:
                return pl.BlockSpec(shape, idx)
            return pl.BlockSpec(shape, idx,
                                pipeline_mode=pl.Buffered(weight_buffers))

        grid_spec = pltpu.PrefetchScalarGridSpec(
            num_scalar_prefetch=0,
            grid=(B, nq),
            in_specs=[
                pl.BlockSpec((None, L_pad, H), lambda b, qi: (b, 0, 0)),          # full seq
                pl.BlockSpec((None, None, 1, L_pad), lambda b, qi: (b, 0, 0, 0)),  # mask
                const((H, E)), const((1, E)),            # wu, bu
                const((H, E + S)), const((1, E + S)),    # fused wv|wqk, bv|bqk
                const((2, S)), const((2, S)),            # gamma, beta
                const((E, H)), const((1, H)),            # wo, bo
            ],
            out_specs=pl.BlockSpec((None, TQ, H), lambda b, qi: (b, qi, 0)),
            scratch_shapes=[
                pltpu.VMEM((L_pad, S), dtype),           # k (whole sequence)
                pltpu.VMEM((L_pad, E), dtype),           # v (whole sequence)
                pltpu.VMEM((L_pad, S), dtype),           # scaled q (whole sequence)
                pltpu.VMEM((1, L_pad), jnp.float32),     # additive key-mask bias
            ],
        )
        return pl.pallas_call(
            kernel,
            out_shape=jax.ShapeDtypeStruct((B, L_pad, H), dtype),
            grid_spec=grid_spec,
            compiler_params=pltpu.CompilerParams(
                dimension_semantics=("parallel", "arbitrary"),
                vmem_limit_bytes=vmem_limit),
        )(hidden_states, attention_mask, wu, bu, wvqk, bvqk, gamma, beta, wo, bo)

    if single_buffer_weights:
        try:
            out = build_and_run(1)       # single-buffer grid-invariant weights
        except Exception:
            out = build_and_run(None)    # fallback: default double-buffering
    else:
        out = build_and_run(None)

    return out[:, :L, :] if L_pad != L else out


def gau_reference(hidden_states, attention_mask, params, *,
                  intermediate_size, attention_key_size, attention_scale=True):
    """Pure-JAX reference mirroring the PyTorch forward (softmax_plus, silu)."""
    E, S = intermediate_size, attention_key_size
    hp = lax.Precision.HIGHEST
    x = jnp.einsum("blh,hd->bld", hidden_states, params["wi"],
                   precision=hp) + params["bi"][0]
    x = x * jax.nn.sigmoid(x)
    u, v, qk = x[..., :E], x[..., E:2 * E], x[..., 2 * E:]
    q = qk * params["gamma"][0] + params["beta"][0]
    k = qk * params["gamma"][1] + params["beta"][1]
    scores = jnp.einsum("bid,bjd->bij", q, k, precision=hp)
    if attention_scale:
        scores = scores / math.sqrt(S)
    am = (1.0 - attention_mask) * -1e12
    scores = scores + jnp.squeeze(am, 1)            # (B,1,L) broadcast over i
    valid = (scores > -1e11).astype(jnp.float32)
    l = jnp.maximum(jnp.sum(valid, -1, keepdims=True), 1.0)
    p = jax.nn.softmax(scores * jnp.log(l) / jnp.log(512.0), axis=-1)
    out = u * jnp.einsum("bij,bjd->bid", p, v, precision=hp)
    return jnp.einsum("bie,eh->bih", out, params["wo"], precision=hp) + params["bo"][0]


if __name__ == "__main__":
    B, L, H = 2, 8, 32
    E, S = 128, 64     # intermediate_size, attention_key_size (lane-friendly split)

    key = jax.random.PRNGKey(0)
    ks = jax.random.split(key, 8)

    hidden_states = jax.random.normal(ks[0], (B, L, H), dtype=jnp.float32)
    # mask: last two key positions of batch 1 padded
    mask = jnp.ones((B, 1, 1, L), dtype=jnp.float32)
    mask = mask.at[1, :, :, -2:].set(0.0)

    params = {
        # i_dense: Linear(H, 2E+S) stored pre-transposed as (H, 2E+S)
        "wi": jax.random.normal(ks[1], (H, 2 * E + S), dtype=jnp.float32) * 0.1,
        "bi": jax.random.normal(ks[2], (1, 2 * E + S), dtype=jnp.float32) * 0.1,
        # OffsetScale parameters (heads=2)
        "gamma": jax.random.normal(ks[3], (2, S), dtype=jnp.float32),
        "beta": jax.random.normal(ks[4], (2, S), dtype=jnp.float32) * 0.1,
        # o_dense: Linear(E, H) stored pre-transposed as (E, H)
        "wo": jax.random.normal(ks[5], (E, H), dtype=jnp.float32) * 0.1,
        "bo": jax.random.normal(ks[6], (1, H), dtype=jnp.float32) * 0.1,
    }

    # ---- f32 path ----
    out = gated_attention_unit(hidden_states, mask, params,
                               intermediate_size=E, attention_key_size=S)
    out = jax.block_until_ready(out)
    ref = gau_reference(hidden_states, mask, params,
                        intermediate_size=E, attention_key_size=S)
    assert out.shape == (B, L, H)
    assert jnp.allclose(out, ref, atol=2e-3, rtol=2e-3), "f32 mismatch vs reference"

    # ---- padded multi-tile path (L not a multiple of the query tile) ----
    Lp = 12
    hs_p = jax.random.normal(ks[7], (B, Lp, H), dtype=jnp.float32)
    mask_p = jnp.ones((B, 1, 1, Lp), dtype=jnp.float32)
    mask_p = mask_p.at[1, :, :, -3:].set(0.0)
    out_p = gated_attention_unit(hs_p, mask_p, params,
                                 intermediate_size=E, attention_key_size=S,
                                 query_tile=8)
    out_p = jax.block_until_ready(out_p)
    ref_p = gau_reference(hs_p, mask_p, params,
                          intermediate_size=E, attention_key_size=S)
    assert out_p.shape == (B, Lp, H)
    assert jnp.allclose(out_p, ref_p, atol=2e-3, rtol=2e-3), "padded mismatch"

    # ---- bf16 MXU path (bf16 operands, f32 accumulation; looser tolerance) ----
    hs_bf16 = hidden_states.astype(jnp.bfloat16)
    params_bf16 = {k: v.astype(jnp.bfloat16) for k, v in params.items()}
    out_bf16 = gated_attention_unit(hs_bf16, mask, params_bf16,
                                    intermediate_size=E, attention_key_size=S)
    out_bf16 = jax.block_until_ready(out_bf16)
    ref_bf16 = gau_reference(
        hs_bf16.astype(jnp.float32), mask,
        {k: v.astype(jnp.float32) for k, v in params_bf16.items()},
        intermediate_size=E, attention_key_size=S)
    assert jnp.allclose(out_bf16.astype(jnp.float32), ref_bf16,
                        atol=1.5e-2, rtol=5e-2), "bf16 mismatch vs reference"

    print("KERNEL_OK")
</pallas_src>

<mosaic_0001>
module attributes {stable_mosaic.version = 11 : i64} {
  func.func @gau_kernel(%arg0: i32, %arg1: i32, %arg2: memref<1x8x32xf32, #tpu.memory_space<vmem>>, %arg3: memref<1x1x1x8xf32, #tpu.memory_space<vmem>>, %arg4: memref<32x128xf32, #tpu.memory_space<vmem>>, %arg5: memref<1x128xf32, #tpu.memory_space<vmem>>, %arg6: memref<32x192xf32, #tpu.memory_space<vmem>>, %arg7: memref<1x192xf32, #tpu.memory_space<vmem>>, %arg8: memref<2x64xf32, #tpu.memory_space<vmem>>, %arg9: memref<2x64xf32, #tpu.memory_space<vmem>>, %arg10: memref<128x32xf32, #tpu.memory_space<vmem>>, %arg11: memref<1x32xf32, #tpu.memory_space<vmem>>, %arg12: memref<1x8x32xf32, #tpu.memory_space<vmem>>, %arg13: memref<8x64xf32, #tpu.memory_space<vmem>>, %arg14: memref<8x128xf32, #tpu.memory_space<vmem>>, %arg15: memref<8x64xf32, #tpu.memory_space<vmem>>, %arg16: memref<1x8xf32, #tpu.memory_space<vmem>>) attributes {dimension_semantics = [#tpu.dimension_semantics<parallel>, #tpu.dimension_semantics<arbitrary>], iteration_bounds = array<i64: 2, 1>, scalar_prefetch = 0 : i64, scratch_operands = 4 : i64, tpu.core_type = #tpu.core_type<tc>, window_params = [{transform_indices = @transform_0, window_bounds = array<i64: 1, 8, 32>}, {transform_indices = @transform_1, window_bounds = array<i64: 1, 1, 1, 8>}, {pipeline_mode = #tpu.pipeline_mode<synchronous>, transform_indices = @transform_2, window_bounds = array<i64: 32, 128>}, {pipeline_mode = #tpu.pipeline_mode<synchronous>, transform_indices = @transform_3, window_bounds = array<i64: 1, 128>}, {pipeline_mode = #tpu.pipeline_mode<synchronous>, transform_indices = @transform_4, window_bounds = array<i64: 32, 192>}, {pipeline_mode = #tpu.pipeline_mode<synchronous>, transform_indices = @transform_5, window_bounds = array<i64: 1, 192>}, {pipeline_mode = #tpu.pipeline_mode<synchronous>, transform_indices = @transform_6, window_bounds = array<i64: 2, 64>}, {pipeline_mode = #tpu.pipeline_mode<synchronous>, transform_indices = @transform_7, window_bounds = array<i64: 2, 64>}, {pipeline_mode = #tpu.pipeline_mode<synchronous>, transform_indices = @transform_8, window_bounds = array<i64: 128, 32>}, {pipeline_mode = #tpu.pipeline_mode<synchronous>, transform_indices = @transform_9, window_bounds = array<i64: 1, 32>}, {transform_indices = @transform_10, window_bounds = array<i64: 1, 8, 32>}]} {
    %c0_i32 = arith.constant 0 : i32
    %0 = arith.cmpi eq, %arg1, %c0_i32 : i32
    %1 = arith.extui %0 : i1 to i32
    %c0_i32_0 = arith.constant 0 : i32
    %2 = arith.cmpi ne, %1, %c0_i32_0 : i32
    scf.if %2 {
      %c0_26 = arith.constant 0 : index
      %c0_27 = arith.constant 0 : index
      %c0_28 = arith.constant 0 : index
      %c0_29 = arith.constant 0 : index
      %47 = vector.load %arg3[%c0_26, %c0_27, %c0_28, %c0_29] : memref<1x1x1x8xf32, #tpu.memory_space<vmem>>, vector<1x1x1x8xf32>
      %48 = vector.shape_cast %47 : vector<1x1x1x8xf32> to vector<1x8xf32>
      %cst_30 = arith.constant 1.000000e+00 : f32
      %49 = vector.broadcast %cst_30 : f32 to vector<1x8xf32>
      %50 = arith.subf %49, %48 : vector<1x8xf32>
      %cst_31 = arith.constant -9.99999995E+11 : f32
      %51 = vector.broadcast %cst_31 : f32 to vector<1x8xf32>
      %52 = arith.mulf %50, %51 : vector<1x8xf32>
      %c0_32 = arith.constant 0 : index
      %c0_33 = arith.constant 0 : index
      %53 = vector.load %arg16[%c0_32, %c0_33] : memref<1x8xf32, #tpu.memory_space<vmem>>, vector<1x8xf32>
      tpu.vector_store %arg16[%c0_32, %c0_33], %52 {strides = array<i32>} : memref<1x8xf32, #tpu.memory_space<vmem>>, vector<1x8xf32>,
      %cst_34 = arith.constant dense<0.000000e+00> : vector<1xf32>
      %54 = vector.multi_reduction <add>, %48, %cst_34 [1] : vector<1x8xf32> to vector<1xf32>
      %55 = vector.shape_cast %54 : vector<1xf32> to vector<1x1xf32>
      %cst_35 = arith.constant 1.000000e+00 : f32
      %56 = vector.broadcast %cst_35 : f32 to vector<1x1xf32>
      %57 = arith.maximumf %55, %56 : vector<1x1xf32>
      %58 = math.log %57 : vector<1x1xf32>
      %cst_36 = arith.constant 0.16029945 : f32
      %59 = vector.broadcast %cst_36 : f32 to vector<1x1xf32>
      %60 = arith.mulf %58, %59 : vector<1x1xf32>
      %cst_37 = arith.constant 1.250000e-01 : f32
      %61 = vector.broadcast %cst_37 : f32 to vector<1x1xf32>
      %62 = arith.mulf %60, %61 : vector<1x1xf32>
      %c0_38 = arith.constant 0 : index
      %c0_39 = arith.constant 0 : index
      %c0_40 = arith.constant 0 : index
      %63 = vector.load %arg2[%c0_38, %c0_39, %c0_40] : memref<1x8x32xf32, #tpu.memory_space<vmem>>, vector<1x8x32xf32>
      %64 = vector.shape_cast %63 : vector<1x8x32xf32> to vector<8x32xf32>
      %c0_41 = arith.constant 0 : index
      %c0_42 = arith.constant 0 : index
      %65 = vector.load %arg6[%c0_41, %c0_42] : memref<32x192xf32, #tpu.memory_space<vmem>>, vector<32x192xf32>
      %cst_43 = arith.constant dense<0.000000e+00> : vector<8x192xf32>
      %66 = tpu.matmul %64, %65, %cst_43 {dimension_numbers = #tpu.dot_dimension_numbers<[1], [0], [0], [1], [0, 0, 1, 1], [], []>} : vector<8x32xf32>, vector<32x192xf32>, vector<8x192xf32> -> vector<8x192xf32>
      %c0_44 = arith.constant 0 : index
      %c0_45 = arith.constant 0 : index
      %67 = vector.load %arg7[%c0_44, %c0_45] : memref<1x192xf32, #tpu.memory_space<vmem>>, vector<1x192xf32>
      %68 = vector.broadcast %67 : vector<1x192xf32> to vector<8x192xf32>
      %69 = arith.addf %66, %68 : vector<8x192xf32>
      %70 = arith.negf %69 : vector<8x192xf32>
      %71 = math.exp %70 : vector<8x192xf32>
      %cst_46 = arith.constant 1.000000e+00 : f32
      %72 = vector.broadcast %cst_46 : f32 to vector<8x192xf32>
      %73 = arith.addf %72, %71 : vector<8x192xf32>
      %74 = arith.divf %72, %73 : vector<8x192xf32>
      %75 = arith.mulf %69, %74 : vector<8x192xf32>
      %76 = vector.extract_strided_slice %75 {offsets = [0, 0], sizes = [8, 128], strides = [1, 1]} : vector<8x192xf32> to vector<8x128xf32>
      %77 = vector.extract_strided_slice %75 {offsets = [0, 128], sizes = [8, 64], strides = [1, 1]} : vector<8x192xf32> to vector<8x64xf32>
      %c0_47 = arith.constant 0 : index
      %c0_48 = arith.constant 0 : index
      %78 = vector.load %arg8[%c0_47, %c0_48] : memref<2x64xf32, #tpu.memory_space<vmem>>, vector<2x64xf32>
      %c0_49 = arith.constant 0 : index
      %c0_50 = arith.constant 0 : index
      %79 = vector.load %arg9[%c0_49, %c0_50] : memref<2x64xf32, #tpu.memory_space<vmem>>, vector<2x64xf32>
      %c0_51 = arith.constant 0 : index
      %c0_52 = arith.constant 0 : index
      %80 = vector.load %arg14[%c0_51, %c0_52] : memref<8x128xf32, #tpu.memory_space<vmem>>, vector<8x128xf32>
      tpu.vector_store %arg14[%c0_51, %c0_52], %76 {strides = array<i32>} : memref<8x128xf32, #tpu.memory_space<vmem>>, vector<8x128xf32>,
      %81 = vector.extract_strided_slice %78 {offsets = [1, 0], sizes = [1, 64], strides = [1, 1]} : vector<2x64xf32> to vector<1x64xf32>
      %82 = vector.broadcast %81 : vector<1x64xf32> to vector<8x64xf32>
      %83 = arith.mulf %77, %82 : vector<8x64xf32>
      %84 = vector.extract_strided_slice %79 {offsets = [1, 0], sizes = [1, 64], strides = [1, 1]} : vector<2x64xf32> to vector<1x64xf32>
      %85 = vector.broadcast %84 : vector<1x64xf32> to vector<8x64xf32>
      %86 = arith.addf %83, %85 : vector<8x64xf32>
      %c0_53 = arith.constant 0 : index
      %c0_54 = arith.constant 0 : index
      %87 = vector.load %arg13[%c0_53, %c0_54] : memref<8x64xf32, #tpu.memory_space<vmem>>, vector<8x64xf32>
      tpu.vector_store %arg13[%c0_53, %c0_54], %86 {strides = array<i32>} : memref<8x64xf32, #tpu.memory_space<vmem>>, vector<8x64xf32>,
      %88 = vector.extract_strided_slice %78 {offsets = [0, 0], sizes = [1, 64], strides = [1, 1]} : vector<2x64xf32> to vector<1x64xf32>
      %89 = vector.broadcast %88 : vector<1x64xf32> to vector<8x64xf32>
      %90 = arith.mulf %77, %89 : vector<8x64xf32>
      %91 = vector.extract_strided_slice %79 {offsets = [0, 0], sizes = [1, 64], strides = [1, 1]} : vector<2x64xf32> to vector<1x64xf32>
      %92 = vector.broadcast %91 : vector<1x64xf32> to vector<8x64xf32>
      %93 = arith.addf %90, %92 : vector<8x64xf32>
      %94 = vector.broadcast %62 : vector<1x1xf32> to vector<8x64xf32>
      %95 = arith.mulf %93, %94 : vector<8x64xf32>
      %c0_55 = arith.constant 0 : index
      %c0_56 = arith.constant 0 : index
      %96 = vector.load %arg15[%c0_55, %c0_56] : memref<8x64xf32, #tpu.memory_space<vmem>>, vector<8x64xf32>
      tpu.vector_store %arg15[%c0_55, %c0_56], %95 {strides = array<i32>} : memref<8x64xf32, #tpu.memory_space<vmem>>, vector<8x64xf32>,
    } else {
    }
    %c8_i32 = arith.constant 8 : i32
    %3 = arith.muli %arg1, %c8_i32 : i32
    %4 = tpu.assume_multiple %3, 8 : i32
    %c0 = arith.constant 0 : index
    %5 = arith.index_cast %4 : i32 to index
    %c0_1 = arith.constant 0 : index
    %6 = vector.load %arg2[%c0, %5, %c0_1] : memref<1x8x32xf32, #tpu.memory_space<vmem>>, vector<1x8x32xf32>
    %7 = vector.shape_cast %6 : vector<1x8x32xf32> to vector<8x32xf32>
    %c0_2 = arith.constant 0 : index
    %c0_3 = arith.constant 0 : index
    %8 = vector.load %arg4[%c0_2, %c0_3] : memref<32x128xf32, #tpu.memory_space<vmem>>, vector<32x128xf32>
    %cst = arith.constant dense<0.000000e+00> : vector<8x128xf32>
    %9 = tpu.matmul %7, %8, %cst {dimension_numbers = #tpu.dot_dimension_numbers<[1], [0], [0], [1], [0, 0, 1, 1], [], []>} : vector<8x32xf32>, vector<32x128xf32>, vector<8x128xf32> -> vector<8x128xf32>
    %c0_4 = arith.constant 0 : index
    %c0_5 = arith.constant 0 : index
    %10 = vector.load %arg5[%c0_4, %c0_5] : memref<1x128xf32, #tpu.memory_space<vmem>>, vector<1x128xf32>
    %11 = vector.broadcast %10 : vector<1x128xf32> to vector<8x128xf32>
    %12 = arith.addf %9, %11 : vector<8x128xf32>
    %13 = arith.negf %12 : vector<8x128xf32>
    %14 = math.exp %13 : vector<8x128xf32>
    %cst_6 = arith.constant 1.000000e+00 : f32
    %15 = vector.broadcast %cst_6 : f32 to vector<8x128xf32>
    %16 = arith.addf %15, %14 : vector<8x128xf32>
    %17 = arith.divf %15, %16 : vector<8x128xf32>
    %18 = arith.mulf %12, %17 : vector<8x128xf32>
    %19 = arith.index_cast %4 : i32 to index
    %c0_7 = arith.constant 0 : index
    %20 = vector.load %arg15[%19, %c0_7] : memref<8x64xf32, #tpu.memory_space<vmem>>, vector<8x64xf32>
    %c0_8 = arith.constant 0 : index
    %c0_9 = arith.constant 0 : index
    %21 = vector.load %arg13[%c0_8, %c0_9] : memref<8x64xf32, #tpu.memory_space<vmem>>, vector<8x64xf32>
    %cst_10 = arith.constant dense<0.000000e+00> : vector<8x8xf32>
    %22 = tpu.matmul %20, %21, %cst_10 {dimension_numbers = #tpu.dot_dimension_numbers<[1], [1], [0], [0], [0, 0, 1, 0], [], []>} : vector<8x64xf32>, vector<8x64xf32>, vector<8x8xf32> -> vector<8x8xf32>
    %c0_11 = arith.constant 0 : index
    %c0_12 = arith.constant 0 : index
    %23 = vector.load %arg16[%c0_11, %c0_12] : memref<1x8xf32, #tpu.memory_space<vmem>>, vector<1x8xf32>
    %24 = vector.broadcast %23 : vector<1x8xf32> to vector<8x8xf32>
    %25 = arith.addf %22, %24 : vector<8x8xf32>
    %cst_13 = arith.constant dense<0xFF800000> : vector<8xf32>
    %26 = vector.multi_reduction <maximumf>, %25, %cst_13 [1] : vector<8x8xf32> to vector<8xf32>
    %27 = vector.shape_cast %26 : vector<8xf32> to vector<8x1xf32>
    %28 = vector.broadcast %27 : vector<8x1xf32> to vector<8x8xf32>
    %29 = arith.subf %25, %28 : vector<8x8xf32>
    %30 = math.exp %29 : vector<8x8xf32>
    %cst_14 = arith.constant dense<0.000000e+00> : vector<8xf32>
    %31 = vector.multi_reduction <add>, %30, %cst_14 [1] : vector<8x8xf32> to vector<8xf32>
    %32 = vector.shape_cast %31 : vector<8xf32> to vector<8x1xf32>
    %33 = tpu.reciprocal %32 {approx = true} : vector<8x1xf32> -> vector<8x1xf32>
    %34 = vector.broadcast %33 : vector<8x1xf32> to vector<8x8xf32>
    %35 = arith.mulf %30, %34 : vector<8x8xf32>
    %c0_15 = arith.constant 0 : index
    %c0_16 = arith.constant 0 : index
    %36 = vector.load %arg14[%c0_15, %c0_16] : memref<8x128xf32, #tpu.memory_space<vmem>>, vector<8x128xf32>
    %cst_17 = arith.constant dense<0.000000e+00> : vector<8x128xf32>
    %37 = tpu.matmul %35, %36, %cst_17 {dimension_numbers = #tpu.dot_dimension_numbers<[1], [0], [0], [1], [0, 0, 1, 1], [], []>} : vector<8x8xf32>, vector<8x128xf32>, vector<8x128xf32> -> vector<8x128xf32>
    %38 = arith.mulf %18, %37 : vector<8x128xf32>
    %c0_18 = arith.constant 0 : index
    %c0_19 = arith.constant 0 : index
    %39 = vector.load %arg10[%c0_18, %c0_19] : memref<128x32xf32, #tpu.memory_space<vmem>>, vector<128x32xf32>
    %cst_20 = arith.constant dense<0.000000e+00> : vector<8x32xf32>
    %40 = tpu.matmul %38, %39, %cst_20 {dimension_numbers = #tpu.dot_dimension_numbers<[1], [0], [0], [1], [0, 0, 1, 1], [], []>} : vector<8x128xf32>, vector<128x32xf32>, vector<8x32xf32> -> vector<8x32xf32>
    %c0_21 = arith.constant 0 : index
    %c0_22 = arith.constant 0 : index
    %41 = vector.load %arg11[%c0_21, %c0_22] : memref<1x32xf32, #tpu.memory_space<vmem>>, vector<1x32xf32>
    %42 = vector.broadcast %41 : vector<1x32xf32> to vector<8x32xf32>
    %43 = arith.addf %40, %42 : vector<8x32xf32>
    %c0_23 = arith.constant 0 : index
    %c0_24 = arith.constant 0 : index
    %c0_25 = arith.constant 0 : index
    %44 = vector.load %arg12[%c0_23, %c0_24, %c0_25] : memref<1x8x32xf32, #tpu.memory_space<vmem>>, vector<1x8x32xf32>
    %45 = vector.shape_cast %44 : vector<1x8x32xf32> to vector<8x32xf32>
    %46 = vector.shape_cast %43 : vector<8x32xf32> to vector<1x8x32xf32>
    tpu.vector_store %arg12[%c0_23, %c0_24, %c0_25], %46 {strides = array<i32>} : memref<1x8x32xf32, #tpu.memory_space<vmem>>, vector<1x8x32xf32>,
    return
  }
  func.func @transform_0(%arg0: i32, %arg1: i32) -> (i32, i32, i32) {
    %c0_i32 = arith.constant 0 : i32
    %c0_i32_0 = arith.constant 0 : i32
    %c0_i32_1 = arith.constant 0 : i32
    return %arg0, %c0_i32, %c0_i32_0 : i32, i32, i32
  }
  func.func @transform_1(%arg0: i32, %arg1: i32) -> (i32, i32, i32, i32) {
    %c0_i32 = arith.constant 0 : i32
    %c0_i32_0 = arith.constant 0 : i32
    %c0_i32_1 = arith.constant 0 : i32
    %c0_i32_2 = arith.constant 0 : i32
    return %arg0, %c0_i32, %c0_i32_0, %c0_i32_1 : i32, i32, i32, i32
  }
  func.func @transform_2(%arg0: i32, %arg1: i32) -> (i32, i32) {
    %c0_i32 = arith.constant 0 : i32
    %c0_i32_0 = arith.constant 0 : i32
    %c0_i32_1 = arith.constant 0 : i32
    return %c0_i32, %c0_i32_0 : i32, i32
  }
  func.func @transform_3(%arg0: i32, %arg1: i32) -> (i32, i32) {
    %c0_i32 = arith.constant 0 : i32
    %c0_i32_0 = arith.constant 0 : i32
    %c0_i32_1 = arith.constant 0 : i32
    return %c0_i32, %c0_i32_0 : i32, i32
  }
  func.func @transform_4(%arg0: i32, %arg1: i32) -> (i32, i32) {
    %c0_i32 = arith.constant 0 : i32
    %c0_i32_0 = arith.constant 0 : i32
    %c0_i32_1 = arith.constant 0 : i32
    return %c0_i32, %c0_i32_0 : i32, i32
  }
  func.func @transform_5(%arg0: i32, %arg1: i32) -> (i32, i32) {
    %c0_i32 = arith.constant 0 : i32
    %c0_i32_0 = arith.constant 0 : i32
    %c0_i32_1 = arith.constant 0 : i32
    return %c0_i32, %c0_i32_0 : i32, i32
  }
  func.func @transform_6(%arg0: i32, %arg1: i32) -> (i32, i32) {
    %c0_i32 = arith.constant 0 : i32
    %c0_i32_0 = arith.constant 0 : i32
    %c0_i32_1 = arith.constant 0 : i32
    return %c0_i32, %c0_i32_0 : i32, i32
  }
  func.func @transform_7(%arg0: i32, %arg1: i32) -> (i32, i32) {
    %c0_i32 = arith.constant 0 : i32
    %c0_i32_0 = arith.constant 0 : i32
    %c0_i32_1 = arith.constant 0 : i32
    return %c0_i32, %c0_i32_0 : i32, i32
  }
  func.func @transform_8(%arg0: i32, %arg1: i32) -> (i32, i32) {
    %c0_i32 = arith.constant 0 : i32
    %c0_i32_0 = arith.constant 0 : i32
    %c0_i32_1 = arith.constant 0 : i32
    return %c0_i32, %c0_i32_0 : i32, i32
  }
  func.func @transform_9(%arg0: i32, %arg1: i32) -> (i32, i32) {
    %c0_i32 = arith.constant 0 : i32
    %c0_i32_0 = arith.constant 0 : i32
    %c0_i32_1 = arith.constant 0 : i32
    return %c0_i32, %c0_i32_0 : i32, i32
  }
  func.func @transform_10(%arg0: i32, %arg1: i32) -> (i32, i32, i32) {
    %c0_i32 = arith.constant 0 : i32
    %c0_i32_0 = arith.constant 0 : i32
    return %arg0, %arg1, %c0_i32 : i32, i32, i32
  }
}

module attributes {stable_mosaic.version = 11 : i64} {
  func.func @gau_kernel(%arg0: i32, %arg1: i32, %arg2: memref<1x8x32xf32, #tpu.memory_space<vmem>>, %arg3: memref<1x1x1x8xf32, #tpu.memory_space<vmem>>, %arg4: memref<32x128xf32, #tpu.memory_space<vmem>>, %arg5: memref<1x128xf32, #tpu.memory_space<vmem>>, %arg6: memref<32x192xf32, #tpu.memory_space<vmem>>, %arg7: memref<1x192xf32, #tpu.memory_space<vmem>>, %arg8: memref<2x64xf32, #tpu.memory_space<vmem>>, %arg9: memref<2x64xf32, #tpu.memory_space<vmem>>, %arg10: memref<128x32xf32, #tpu.memory_space<vmem>>, %arg11: memref<1x32xf32, #tpu.memory_space<vmem>>, %arg12: memref<1x8x32xf32, #tpu.memory_space<vmem>>, %arg13: memref<8x64xf32, #tpu.memory_space<vmem>>, %arg14: memref<8x128xf32, #tpu.memory_space<vmem>>, %arg15: memref<8x64xf32, #tpu.memory_space<vmem>>, %arg16: memref<1x8xf32, #tpu.memory_space<vmem>>) attributes {dimension_semantics = [#tpu.dimension_semantics<parallel>, #tpu.dimension_semantics<arbitrary>], iteration_bounds = array<i64: 2, 1>, scalar_prefetch = 0 : i64, scratch_operands = 4 : i64, tpu.core_type = #tpu.core_type<tc>, window_params = [{transform_indices = @transform_0, window_bounds = array<i64: 1, 8, 32>}, {transform_indices = @transform_1, window_bounds = array<i64: 1, 1, 1, 8>}, {pipeline_mode = #tpu.pipeline_mode<synchronous>, transform_indices = @transform_2, window_bounds = array<i64: 32, 128>}, {pipeline_mode = #tpu.pipeline_mode<synchronous>, transform_indices = @transform_3, window_bounds = array<i64: 1, 128>}, {pipeline_mode = #tpu.pipeline_mode<synchronous>, transform_indices = @transform_4, window_bounds = array<i64: 32, 192>}, {pipeline_mode = #tpu.pipeline_mode<synchronous>, transform_indices = @transform_5, window_bounds = array<i64: 1, 192>}, {pipeline_mode = #tpu.pipeline_mode<synchronous>, transform_indices = @transform_6, window_bounds = array<i64: 2, 64>}, {pipeline_mode = #tpu.pipeline_mode<synchronous>, transform_indices = @transform_7, window_bounds = array<i64: 2, 64>}, {pipeline_mode = #tpu.pipeline_mode<synchronous>, transform_indices = @transform_8, window_bounds = array<i64: 128, 32>}, {pipeline_mode = #tpu.pipeline_mode<synchronous>, transform_indices = @transform_9, window_bounds = array<i64: 1, 32>}, {transform_indices = @transform_10, window_bounds = array<i64: 1, 8, 32>}]} {
    %c0_i32 = arith.constant 0 : i32
    %0 = arith.cmpi eq, %arg1, %c0_i32 : i32
    %1 = arith.extui %0 : i1 to i32
    %c0_i32_0 = arith.constant 0 : i32
    %2 = arith.cmpi ne, %1, %c0_i32_0 : i32
    scf.if %2 {
      %c0_26 = arith.constant 0 : index
      %c0_27 = arith.constant 0 : index
      %c0_28 = arith.constant 0 : index
      %c0_29 = arith.constant 0 : index
      %47 = vector.load %arg3[%c0_26, %c0_27, %c0_28, %c0_29] : memref<1x1x1x8xf32, #tpu.memory_space<vmem>>, vector<1x1x1x8xf32>
      %48 = vector.shape_cast %47 : vector<1x1x1x8xf32> to vector<1x8xf32>
      %cst_30 = arith.constant 1.000000e+00 : f32
      %49 = vector.broadcast %cst_30 : f32 to vector<1x8xf32>
      %50 = arith.subf %49, %48 : vector<1x8xf32>
      %cst_31 = arith.constant -9.99999995E+11 : f32
      %51 = vector.broadcast %cst_31 : f32 to vector<1x8xf32>
      %52 = arith.mulf %50, %51 : vector<1x8xf32>
      %c0_32 = arith.constant 0 : index
      %c0_33 = arith.constant 0 : index
      %53 = vector.load %arg16[%c0_32, %c0_33] : memref<1x8xf32, #tpu.memory_space<vmem>>, vector<1x8xf32>
      tpu.vector_store %arg16[%c0_32, %c0_33], %52 {strides = array<i32>} : memref<1x8xf32, #tpu.memory_space<vmem>>, vector<1x8xf32>,
      %cst_34 = arith.constant dense<0.000000e+00> : vector<1xf32>
      %54 = vector.multi_reduction <add>, %48, %cst_34 [1] : vector<1x8xf32> to vector<1xf32>
      %55 = vector.shape_cast %54 : vector<1xf32> to vector<1x1xf32>
      %cst_35 = arith.constant 1.000000e+00 : f32
      %56 = vector.broadcast %cst_35 : f32 to vector<1x1xf32>
      %57 = arith.maximumf %55, %56 : vector<1x1xf32>
      %58 = math.log %57 : vector<1x1xf32>
      %cst_36 = arith.constant 0.16029945 : f32
      %59 = vector.broadcast %cst_36 : f32 to vector<1x1xf32>
      %60 = arith.mulf %58, %59 : vector<1x1xf32>
      %cst_37 = arith.constant 1.250000e-01 : f32
      %61 = vector.broadcast %cst_37 : f32 to vector<1x1xf32>
      %62 = arith.mulf %60, %61 : vector<1x1xf32>
      %c0_38 = arith.constant 0 : index
      %c0_39 = arith.constant 0 : index
      %c0_40 = arith.constant 0 : index
      %63 = vector.load %arg2[%c0_38, %c0_39, %c0_40] : memref<1x8x32xf32, #tpu.memory_space<vmem>>, vector<1x8x32xf32>
      %64 = vector.shape_cast %63 : vector<1x8x32xf32> to vector<8x32xf32>
      %c0_41 = arith.constant 0 : index
      %c0_42 = arith.constant 0 : index
      %65 = vector.load %arg6[%c0_41, %c0_42] : memref<32x192xf32, #tpu.memory_space<vmem>>, vector<32x192xf32>
      %cst_43 = arith.constant dense<0.000000e+00> : vector<8x192xf32>
      %66 = tpu.matmul %64, %65, %cst_43 {dimension_numbers = #tpu.dot_dimension_numbers<[1], [0], [0], [1], [0, 0, 1, 1], [], []>} : vector<8x32xf32>, vector<32x192xf32>, vector<8x192xf32> -> vector<8x192xf32>
      %c0_44 = arith.constant 0 : index
      %c0_45 = arith.constant 0 : index
      %67 = vector.load %arg7[%c0_44, %c0_45] : memref<1x192xf32, #tpu.memory_space<vmem>>, vector<1x192xf32>
      %68 = vector.broadcast %67 : vector<1x192xf32> to vector<8x192xf32>
      %69 = arith.addf %66, %68 : vector<8x192xf32>
      %70 = arith.negf %69 : vector<8x192xf32>
      %71 = math.exp %70 : vector<8x192xf32>
      %cst_46 = arith.constant 1.000000e+00 : f32
      %72 = vector.broadcast %cst_46 : f32 to vector<8x192xf32>
      %73 = arith.addf %72, %71 : vector<8x192xf32>
      %74 = arith.divf %72, %73 : vector<8x192xf32>
      %75 = arith.mulf %69, %74 : vector<8x192xf32>
      %76 = vector.extract_strided_slice %75 {offsets = [0, 0], sizes = [8, 128], strides = [1, 1]} : vector<8x192xf32> to vector<8x128xf32>
      %77 = vector.extract_strided_slice %75 {offsets = [0, 128], sizes = [8, 64], strides = [1, 1]} : vector<8x192xf32> to vector<8x64xf32>
      %c0_47 = arith.constant 0 : index
      %c0_48 = arith.constant 0 : index
      %78 = vector.load %arg8[%c0_47, %c0_48] : memref<2x64xf32, #tpu.memory_space<vmem>>, vector<2x64xf32>
      %c0_49 = arith.constant 0 : index
      %c0_50 = arith.constant 0 : index
      %79 = vector.load %arg9[%c0_49, %c0_50] : memref<2x64xf32, #tpu.memory_space<vmem>>, vector<2x64xf32>
      %c0_51 = arith.constant 0 : index
      %c0_52 = arith.constant 0 : index
      %80 = vector.load %arg14[%c0_51, %c0_52] : memref<8x128xf32, #tpu.memory_space<vmem>>, vector<8x128xf32>
      tpu.vector_store %arg14[%c0_51, %c0_52], %76 {strides = array<i32>} : memref<8x128xf32, #tpu.memory_space<vmem>>, vector<8x128xf32>,
      %81 = vector.extract_strided_slice %78 {offsets = [1, 0], sizes = [1, 64], strides = [1, 1]} : vector<2x64xf32> to vector<1x64xf32>
      %82 = vector.broadcast %81 : vector<1x64xf32> to vector<8x64xf32>
      %83 = arith.mulf %77, %82 : vector<8x64xf32>
      %84 = vector.extract_strided_slice %79 {offsets = [1, 0], sizes = [1, 64], strides = [1, 1]} : vector<2x64xf32> to vector<1x64xf32>
      %85 = vector.broadcast %84 : vector<1x64xf32> to vector<8x64xf32>
      %86 = arith.addf %83, %85 : vector<8x64xf32>
      %c0_53 = arith.constant 0 : index
      %c0_54 = arith.constant 0 : index
      %87 = vector.load %arg13[%c0_53, %c0_54] : memref<8x64xf32, #tpu.memory_space<vmem>>, vector<8x64xf32>
      tpu.vector_store %arg13[%c0_53, %c0_54], %86 {strides = array<i32>} : memref<8x64xf32, #tpu.memory_space<vmem>>, vector<8x64xf32>,
      %88 = vector.extract_strided_slice %78 {offsets = [0, 0], sizes = [1, 64], strides = [1, 1]} : vector<2x64xf32> to vector<1x64xf32>
      %89 = vector.broadcast %88 : vector<1x64xf32> to vector<8x64xf32>
      %90 = arith.mulf %77, %89 : vector<8x64xf32>
      %91 = vector.extract_strided_slice %79 {offsets = [0, 0], sizes = [1, 64], strides = [1, 1]} : vector<2x64xf32> to vector<1x64xf32>
      %92 = vector.broadcast %91 : vector<1x64xf32> to vector<8x64xf32>
      %93 = arith.addf %90, %92 : vector<8x64xf32>
      %94 = vector.broadcast %62 : vector<1x1xf32> to vector<8x64xf32>
      %95 = arith.mulf %93, %94 : vector<8x64xf32>
      %c0_55 = arith.constant 0 : index
      %c0_56 = arith.constant 0 : index
      %96 = vector.load %arg15[%c0_55, %c0_56] : memref<8x64xf32, #tpu.memory_space<vmem>>, vector<8x64xf32>
      tpu.vector_store %arg15[%c0_55, %c0_56], %95 {strides = array<i32>} : memref<8x64xf32, #tpu.memory_space<vmem>>, vector<8x64xf32>,
    } else {
    }
    %c8_i32 = arith.constant 8 : i32
    %3 = arith.muli %arg1, %c8_i32 : i32
    %4 = tpu.assume_multiple %3, 8 : i32
    %c0 = arith.constant 0 : index
    %5 = arith.index_cast %4 : i32 to index
    %c0_1 = arith.constant 0 : index
    %6 = vector.load %arg2[%c0, %5, %c0_1] : memref<1x8x32xf32, #tpu.memory_space<vmem>>, vector<1x8x32xf32>
    %7 = vector.shape_cast %6 : vector<1x8x32xf32> to vector<8x32xf32>
    %c0_2 = arith.constant 0 : index
    %c0_3 = arith.constant 0 : index
    %8 = vector.load %arg4[%c0_2, %c0_3] : memref<32x128xf32, #tpu.memory_space<vmem>>, vector<32x128xf32>
    %cst = arith.constant dense<0.000000e+00> : vector<8x128xf32>
    %9 = tpu.matmul %7, %8, %cst {dimension_numbers = #tpu.dot_dimension_numbers<[1], [0], [0], [1], [0, 0, 1, 1], [], []>} : vector<8x32xf32>, vector<32x128xf32>, vector<8x128xf32> -> vector<8x128xf32>
    %c0_4 = arith.constant 0 : index
    %c0_5 = arith.constant 0 : index
    %10 = vector.load %arg5[%c0_4, %c0_5] : memref<1x128xf32, #tpu.memory_space<vmem>>, vector<1x128xf32>
    %11 = vector.broadcast %10 : vector<1x128xf32> to vector<8x128xf32>
    %12 = arith.addf %9, %11 : vector<8x128xf32>
    %13 = arith.negf %12 : vector<8x128xf32>
    %14 = math.exp %13 : vector<8x128xf32>
    %cst_6 = arith.constant 1.000000e+00 : f32
    %15 = vector.broadcast %cst_6 : f32 to vector<8x128xf32>
    %16 = arith.addf %15, %14 : vector<8x128xf32>
    %17 = arith.divf %15, %16 : vector<8x128xf32>
    %18 = arith.mulf %12, %17 : vector<8x128xf32>
    %19 = arith.index_cast %4 : i32 to index
    %c0_7 = arith.constant 0 : index
    %20 = vector.load %arg15[%19, %c0_7] : memref<8x64xf32, #tpu.memory_space<vmem>>, vector<8x64xf32>
    %c0_8 = arith.constant 0 : index
    %c0_9 = arith.constant 0 : index
    %21 = vector.load %arg13[%c0_8, %c0_9] : memref<8x64xf32, #tpu.memory_space<vmem>>, vector<8x64xf32>
    %cst_10 = arith.constant dense<0.000000e+00> : vector<8x8xf32>
    %22 = tpu.matmul %20, %21, %cst_10 {dimension_numbers = #tpu.dot_dimension_numbers<[1], [1], [0], [0], [0, 0, 1, 0], [], []>} : vector<8x64xf32>, vector<8x64xf32>, vector<8x8xf32> -> vector<8x8xf32>
    %c0_11 = arith.constant 0 : index
    %c0_12 = arith.constant 0 : index
    %23 = vector.load %arg16[%c0_11, %c0_12] : memref<1x8xf32, #tpu.memory_space<vmem>>, vector<1x8xf32>
    %24 = vector.broadcast %23 : vector<1x8xf32> to vector<8x8xf32>
    %25 = arith.addf %22, %24 : vector<8x8xf32>
    %cst_13 = arith.constant dense<0xFF800000> : vector<8xf32>
    %26 = vector.multi_reduction <maximumf>, %25, %cst_13 [1] : vector<8x8xf32> to vector<8xf32>
    %27 = vector.shape_cast %26 : vector<8xf32> to vector<8x1xf32>
    %28 = vector.broadcast %27 : vector<8x1xf32> to vector<8x8xf32>
    %29 = arith.subf %25, %28 : vector<8x8xf32>
    %30 = math.exp %29 : vector<8x8xf32>
    %cst_14 = arith.constant dense<0.000000e+00> : vector<8xf32>
    %31 = vector.multi_reduction <add>, %30, %cst_14 [1] : vector<8x8xf32> to vector<8xf32>
    %32 = vector.shape_cast %31 : vector<8xf32> to vector<8x1xf32>
    %33 = tpu.reciprocal %32 {approx = true} : vector<8x1xf32> -> vector<8x1xf32>
    %34 = vector.broadcast %33 : vector<8x1xf32> to vector<8x8xf32>
    %35 = arith.mulf %30, %34 : vector<8x8xf32>
    %c0_15 = arith.constant 0 : index
    %c0_16 = arith.constant 0 : index
    %36 = vector.load %arg14[%c0_15, %c0_16] : memref<8x128xf32, #tpu.memory_space<vmem>>, vector<8x128xf32>
    %cst_17 = arith.constant dense<0.000000e+00> : vector<8x128xf32>
    %37 = tpu.matmul %35, %36, %cst_17 {dimension_numbers = #tpu.dot_dimension_numbers<[1], [0], [0], [1], [0, 0, 1, 1], [], []>} : vector<8x8xf32>, vector<8x128xf32>, vector<8x128xf32> -> vector<8x128xf32>
    %38 = arith.mulf %18, %37 : vector<8x128xf32>
    %c0_18 = arith.constant 0 : index
    %c0_19 = arith.constant 0 : index
    %39 = vector.load %arg10[%c0_18, %c0_19] : memref<128x32xf32, #tpu.memory_space<vmem>>, vector<128x32xf32>
    %cst_20 = arith.constant dense<0.000000e+00> : vector<8x32xf32>
    %40 = tpu.matmul %38, %39, %cst_20 {dimension_numbers = #tpu.dot_dimension_numbers<[1], [0], [0], [1], [0, 0, 1, 1], [], []>} : vector<8x128xf32>, vector<128x32xf32>, vector<8x32xf32> -> vector<8x32xf32>
    %c0_21 = arith.constant 0 : index
    %c0_22 = arith.constant 0 : index
    %41 = vector.load %arg11[%c0_21, %c0_22] : memref<1x32xf32, #tpu.memory_space<vmem>>, vector<1x32xf32>
    %42 = vector.broadcast %41 : vector<1x32xf32> to vector<8x32xf32>
    %43 = arith.addf %40, %42 : vector<8x32xf32>
    %c0_23 = arith.constant 0 : index
    %c0_24 = arith.constant 0 : index
    %c0_25 = arith.constant 0 : index
    %44 = vector.load %arg12[%c0_23, %c0_24, %c0_25] : memref<1x8x32xf32, #tpu.memory_space<vmem>>, vector<1x8x32xf32>
    %45 = vector.shape_cast %44 : vector<1x8x32xf32> to vector<8x32xf32>
    %46 = vector.shape_cast %43 : vector<8x32xf32> to vector<1x8x32xf32>
    tpu.vector_store %arg12[%c0_23, %c0_24, %c0_25], %46 {strides = array<i32>} : memref<1x8x32xf32, #tpu.memory_space<vmem>>, vector<1x8x32xf32>,
    return
  }
  func.func @transform_0(%arg0: i32, %arg1: i32) -> (i32, i32, i32) {
    %c0_i32 = arith.constant 0 : i32
    %c0_i32_0 = arith.constant 0 : i32
    %c0_i32_1 = arith.constant 0 : i32
    return %arg0, %c0_i32, %c0_i32_0 : i32, i32, i32
  }
  func.func @transform_1(%arg0: i32, %arg1: i32) -> (i32, i32, i32, i32) {
    %c0_i32 = arith.constant 0 : i32
    %c0_i32_0 = arith.constant 0 : i32
    %c0_i32_1 = arith.constant 0 : i32
    %c0_i32_2 = arith.constant 0 : i32
    return %arg0, %c0_i32, %c0_i32_0, %c0_i32_1 : i32, i32, i32, i32
  }
  func.func @transform_2(%arg0: i32, %arg1: i32) -> (i32, i32) {
    %c0_i32 = arith.constant 0 : i32
    %c0_i32_0 = arith.constant 0 : i32
    %c0_i32_1 = arith.constant 0 : i32
    return %c0_i32, %c0_i32_0 : i32, i32
  }
  func.func @transform_3(%arg0: i32, %arg1: i32) -> (i32, i32) {
    %c0_i32 = arith.constant 0 : i32
    %c0_i32_0 = arith.constant 0 : i32
    %c0_i32_1 = arith.constant 0 : i32
    return %c0_i32, %c0_i32_0 : i32, i32
  }
  func.func @transform_4(%arg0: i32, %arg1: i32) -> (i32, i32) {
    %c0_i32 = arith.constant 0 : i32
    %c0_i32_0 = arith.constant 0 : i32
    %c0_i32_1 = arith.constant 0 : i32
    return %c0_i32, %c0_i32_0 : i32, i32
  }
  func.func @transform_5(%arg0: i32, %arg1: i32) -> (i32, i32) {
    %c0_i32 = arith.constant 0 : i32
    %c0_i32_0 = arith.constant 0 : i32
    %c0_i32_1 = arith.constant 0 : i32
    return %c0_i32, %c0_i32_0 : i32, i32
  }
  func.func @transform_6(%arg0: i32, %arg1: i32) -> (i32, i32) {
    %c0_i32 = arith.constant 0 : i32
    %c0_i32_0 = arith.constant 0 : i32
    %c0_i32_1 = arith.constant 0 : i32
    return %c0_i32, %c0_i32_0 : i32, i32
  }
  func.func @transform_7(%arg0: i32, %arg1: i32) -> (i32, i32) {
    %c0_i32 = arith.constant 0 : i32
    %c0_i32_0 = arith.constant 0 : i32
    %c0_i32_1 = arith.constant 0 : i32
    return %c0_i32, %c0_i32_0 : i32, i32
  }
  func.func @transform_8(%arg0: i32, %arg1: i32) -> (i32, i32) {
    %c0_i32 = arith.constant 0 : i32
    %c0_i32_0 = arith.constant 0 : i32
    %c0_i32_1 = arith.constant 0 : i32
    return %c0_i32, %c0_i32_0 : i32, i32
  }
  func.func @transform_9(%arg0: i32, %arg1: i32) -> (i32, i32) {
    %c0_i32 = arith.constant 0 : i32
    %c0_i32_0 = arith.constant 0 : i32
    %c0_i32_1 = arith.constant 0 : i32
    return %c0_i32, %c0_i32_0 : i32, i32
  }
  func.func @transform_10(%arg0: i32, %arg1: i32) -> (i32, i32, i32) {
    %c0_i32 = arith.constant 0 : i32
    %c0_i32_0 = arith.constant 0 : i32
    return %arg0, %arg1, %c0_i32 : i32, i32, i32
  }
}

</mosaic_0001>

<llo_original>
// kernel: tpu_custom_call.1
$region0: #{tpu_custom_call.1}
  #allocation0 [shape = 'u32[]', space=smem, size = 0x4, offset = 0x4, fixed_abs, tag = 'smem constant byte address 0x4 - core index']
  #allocation1 [shape = 'u32[144,128]{1,0:T(1,128)}', space=vmem, size = 0x12000, scoped, tag = 'internal scratch']
  #allocation2 [shape = 'f32[8,64]{1,0:T(8,128)}', space=vmem, size = 0x1000, scoped, tag = 'scratch operand']
  #allocation3 [shape = 'f32[8,128]{1,0:T(8,128)}', space=vmem, size = 0x1000, scoped, tag = 'scratch operand']
  #allocation4 [shape = 'f32[8,64]{1,0:T(8,128)}', space=vmem, size = 0x1000, scoped, tag = 'scratch operand']
  #allocation5 [shape = 'f32[1,8]{1,0:T(1,128)}', space=vmem, size = 0x200, scoped, tag = 'scratch operand']
  %s0 = inlined_call_operand.vmem [shape: f32[2,8,32], index: 0, kind: input, shape index: {}]
  %s1 = inlined_call_operand.vmem [shape: f32[2,1,1,8], index: 1, kind: input, shape index: {}]
  %s2 = inlined_call_operand.vmem [shape: f32[32,128], index: 2, kind: input, shape index: {}]
  %s3 = inlined_call_operand.vmem [shape: f32[1,128], index: 3, kind: input, shape index: {}]
  %s4 = inlined_call_operand.vmem [shape: f32[32,192], index: 4, kind: input, shape index: {}]
  %s5 = inlined_call_operand.vmem [shape: f32[1,192], index: 5, kind: input, shape index: {}]
  %s6 = inlined_call_operand.vmem [shape: f32[2,64], index: 6, kind: input, shape index: {}]
  %s7 = inlined_call_operand.vmem [shape: f32[2,64], index: 7, kind: input, shape index: {}]
  %s8 = inlined_call_operand.vmem [shape: f32[128,32], index: 8, kind: input, shape index: {}]
  %s9 = inlined_call_operand.vmem [shape: f32[1,32], index: 9, kind: input, shape index: {}]
  %s10 = inlined_call_operand.hbm [shape: f32[2,8,32], index: 10, kind: output, shape index: {}]
  %s11 = sld [smem:[#allocation0]]
  $region77: #{tpu_custom_call.1} parent=0
    _
  %s13 = ssub.s32 1, %s11
  %s14 = scalar_select 0, %s13, %s11
  $region1: #{tpu_custom_call.1} parent=0
    #allocation6 [shape = 'u8[8192]{0}', space=vmem, size = 0x2000, scoped, tag = 'output window, operand 0']
    #allocation7 [shape = 's32[2]{0}', space=sflag, size = 0x8, scoped, tag = 'scoped memory for tpu_custom_call.1']
    %15 = vsyncpa [#allocation7], 0
    %s16 = scalar_lea.sflag [#allocation7], 1
    %17 = vsyncpa %s16, 0
    loop: start=0, step=1, limit=4
    $region2: #{tpu_custom_call.1} parent=1 // loop_pre_header
      _
    $region3: #{tpu_custom_call.1} parent=1 // loop_header
      %s19 = sphi 0, %s23
      %p20 = scmp.ge.s32.totalorder %s19, 4
      %s26 = sphi 0, %s38
      %s27 = sphi 0, %s34
      %s28 = sphi 0, %s26
      %s29 = sphi 0, %s27
      %s30 = sphi 0, %s28
      %s31 = sphi 0, %s29
      %s41 = sphi 0, %s43
      %s44 = sphi 0, %s41
      %s45 = sphi 0, %s44
      %s61 = sphi 0, %s45
      %s67 = sphi 0, %s69
      %s70 = sphi 0, %s67
      %s71 = sphi 0, %s70
      %s87 = sphi 0, %s71
      %s91 = sphi 0, %s91
      %s93 = sphi 0, %s91
      %s94 = sphi 0, %s93
      %s108 = sphi 0, %s94
      %s112 = sphi 0, %s112
      %s114 = sphi 0, %s112
      %s115 = sphi 0, %s114
      %s129 = sphi 0, %s115
      %s133 = sphi 0, %s133
      %s135 = sphi 0, %s133
      %s136 = sphi 0, %s135
      %s150 = sphi 0, %s136
      %s154 = sphi 0, %s154
      %s156 = sphi 0, %s154
      %s157 = sphi 0, %s156
      %s171 = sphi 0, %s157
      %s175 = sphi 0, %s175
      %s177 = sphi 0, %s175
      %s178 = sphi 0, %s177
      %s192 = sphi 0, %s178
      %s196 = sphi 0, %s196
      %s198 = sphi 0, %s196
      %s199 = sphi 0, %s198
      %s213 = sphi 0, %s199
      %s217 = sphi 0, %s217
      %s219 = sphi 0, %s217
      %s220 = sphi 0, %s219
      %s234 = sphi 0, %s220
      %s238 = sphi 0, %s238
      %s240 = sphi 0, %s238
      %s241 = sphi 0, %s240
      %s255 = sphi 0, %s241
      %s263 = sphi 0, %s265
      %s266 = sphi 0, %s263
      %s267 = sphi 0, %s266
      %s283 = sphi 0, %s267
    $region4: #{tpu_custom_call.1} parent=1 // loop_header_branch
      %22 = sbr.rel (%p20) target = $region8
    $region5: #{tpu_custom_call.1} parent=1 // loop_body
      %s24 = ssub.s32 %s19, 1
      %s25 = ssub.s32 %s19, 2
      %s32 = sadd.s32 1, %s27
      %p33 = scmp.ge.s32.totalorder %s32, 1
      %s34 = scalar_select %p33, 0, %s32
      %s35 = sadd.s32 1, %s26
      %s36 = scalar_select %p33, %s35, %s26
      %p37 = scmp.ge.s32.totalorder %s36, 2
      %s38 = scalar_select %p37, 0, %s36
      %s39 = ssub.s32 %s26, %s38
      %p40 = scmp.eq.s32.totalorder %s39, 0
      %s42 = sadd.s32 %s41, 1
      %s43 = scalar_select %p40, %s41, %s42
      %p46 = pneg %p40
      %p47 = scmp.eq.s32.totalorder %s19, 1
      %p48 = por %p46, %p47
      %p49 = scmp.ne.s32.totalorder %s41, %s44
      %p50 = scmp.eq.s32.totalorder %s19, 0
      %p51 = por %p49, %p50
      %p52 = scmp.ne.s32.totalorder %s41, %s44
      %p53 = scmp.eq.s32.totalorder %s24, 1
      %p54 = por %p52, %p53
      %p55 = scmp.ne.s32.totalorder %s44, %s45
      %p56 = scmp.eq.s32.totalorder %s24, 0
      %p57 = por %p55, %p56
      %p58 = scmp.ne.s32.totalorder %s44, %s45
      %p59 = scmp.eq.s32.totalorder %s25, 1
      %p60 = por %p58, %p59
      %p62 = scmp.ne.s32.totalorder %s45, %s61
      %p63 = scmp.eq.s32.totalorder %s25, 0
      %p64 = por %p62, %p63
      %s65 = ssub.s32 %s26, %s38
      %p66 = scmp.eq.s32.totalorder %s65, 0
      %s68 = sadd.s32 %s67, 1
      %s69 = scalar_select %p66, %s67, %s68
      %p72 = pneg %p66
      %p73 = scmp.eq.s32.totalorder %s19, 1
      %p74 = por %p72, %p73
      %p75 = scmp.ne.s32.totalorder %s67, %s70
      %p76 = scmp.eq.s32.totalorder %s19, 0
      %p77 = por %p75, %p76
      %p78 = scmp.ne.s32.totalorder %s67, %s70
      %p79 = scmp.eq.s32.totalorder %s24, 1
      %p80 = por %p78, %p79
      %p81 = scmp.ne.s32.totalorder %s70, %s71
      %p82 = scmp.eq.s32.totalorder %s24, 0
      %p83 = por %p81, %p82
      %p84 = scmp.ne.s32.totalorder %s70, %s71
      %p85 = scmp.eq.s32.totalorder %s25, 1
      %p86 = por %p84, %p85
      %p88 = scmp.ne.s32.totalorder %s71, %s87
      %p89 = scmp.eq.s32.totalorder %s25, 0
      %p90 = por %p88, %p89
      %s92 = sadd.s32 %s91, 1
      %p95 = scmp.eq.s32.totalorder %s19, 1
      %p96 = scmp.ne.s32.totalorder %s91, %s93
      %p97 = scmp.eq.s32.totalorder %s19, 0
      %p98 = por %p96, %p97
      %p99 = scmp.ne.s32.totalorder %s91, %s93
      %p100 = scmp.eq.s32.totalorder %s24, 1
      %p101 = por %p99, %p100
      %p102 = scmp.ne.s32.totalorder %s93, %s94
      %p103 = scmp.eq.s32.totalorder %s24, 0
      %p104 = por %p102, %p103
      %p105 = scmp.ne.s32.totalorder %s93, %s94
      %p106 = scmp.eq.s32.totalorder %s25, 1
      %p107 = por %p105, %p106
      %p109 = scmp.ne.s32.totalorder %s94, %s108
      %p110 = scmp.eq.s32.totalorder %s25, 0
      %p111 = por %p109, %p110
      %s113 = sadd.s32 %s112, 1
      %p116 = scmp.eq.s32.totalorder %s19, 1
      %p117 = scmp.ne.s32.totalorder %s112, %s114
      %p118 = scmp.eq.s32.totalorder %s19, 0
      %p119 = por %p117, %p118
      %p120 = scmp.ne.s32.totalorder %s112, %s114
      %p121 = scmp.eq.s32.totalorder %s24, 1
      %p122 = por %p120, %p121
      %p123 = scmp.ne.s32.totalorder %s114, %s115
      %p124 = scmp.eq.s32.totalorder %s24, 0
      %p125 = por %p123, %p124
      %p126 = scmp.ne.s32.totalorder %s114, %s115
      %p127 = scmp.eq.s32.totalorder %s25, 1
      %p128 = por %p126, %p127
      %p130 = scmp.ne.s32.totalorder %s115, %s129
      %p131 = scmp.eq.s32.totalorder %s25, 0
      %p132 = por %p130, %p131
      %s134 = sadd.s32 %s133, 1
      %p137 = scmp.eq.s32.totalorder %s19, 1
      %p138 = scmp.ne.s32.totalorder %s133, %s135
      %p139 = scmp.eq.s32.totalorder %s19, 0
      %p140 = por %p138, %p139
      %p141 = scmp.ne.s32.totalorder %s133, %s135
      %p142 = scmp.eq.s32.totalorder %s24, 1
      %p143 = por %p141, %p142
      %p144 = scmp.ne.s32.totalorder %s135, %s136
      %p145 = scmp.eq.s32.totalorder %s24, 0
      %p146 = por %p144, %p145
      %p147 = scmp.ne.s32.totalorder %s135, %s136
      %p148 = scmp.eq.s32.totalorder %s25, 1
      %p149 = por %p147, %p148
      %p151 = scmp.ne.s32.totalorder %s136, %s150
      %p152 = scmp.eq.s32.totalorder %s25, 0
      %p153 = por %p151, %p152
      %s155 = sadd.s32 %s154, 1
      %p158 = scmp.eq.s32.totalorder %s19, 1
      %p159 = scmp.ne.s32.totalorder %s154, %s156
      %p160 = scmp.eq.s32.totalorder %s19, 0
      %p161 = por %p159, %p160
      %p162 = scmp.ne.s32.totalorder %s154, %s156
      %p163 = scmp.eq.s32.totalorder %s24, 1
      %p164 = por %p162, %p163
      %p165 = scmp.ne.s32.totalorder %s156, %s157
      %p166 = scmp.eq.s32.totalorder %s24, 0
      %p167 = por %p165, %p166
      %p168 = scmp.ne.s32.totalorder %s156, %s157
      %p169 = scmp.eq.s32.totalorder %s25, 1
      %p170 = por %p168, %p169
      %p172 = scmp.ne.s32.totalorder %s157, %s171
      %p173 = scmp.eq.s32.totalorder %s25, 0
      %p174 = por %p172, %p173
      %s176 = sadd.s32 %s175, 1
      %p179 = scmp.eq.s32.totalorder %s19, 1
      %p180 = scmp.ne.s32.totalorder %s175, %s177
      %p181 = scmp.eq.s32.totalorder %s19, 0
      %p182 = por %p180, %p181
      %p183 = scmp.ne.s32.totalorder %s175, %s177
      %p184 = scmp.eq.s32.totalorder %s24, 1
      %p185 = por %p183, %p184
      %p186 = scmp.ne.s32.totalorder %s177, %s178
      %p187 = scmp.eq.s32.totalorder %s24, 0
      %p188 = por %p186, %p187
      %p189 = scmp.ne.s32.totalorder %s177, %s178
      %p190 = scmp.eq.s32.totalorder %s25, 1
      %p191 = por %p189, %p190
      %p193 = scmp.ne.s32.totalorder %s178, %s192
      %p194 = scmp.eq.s32.totalorder %s25, 0
      %p195 = por %p193, %p194
      %s197 = sadd.s32 %s196, 1
      %p200 = scmp.eq.s32.totalorder %s19, 1
      %p201 = scmp.ne.s32.totalorder %s196, %s198
      %p202 = scmp.eq.s32.totalorder %s19, 0
      %p203 = por %p201, %p202
      %p204 = scmp.ne.s32.totalorder %s196, %s198
      %p205 = scmp.eq.s32.totalorder %s24, 1
      %p206 = por %p204, %p205
      %p207 = scmp.ne.s32.totalorder %s198, %s199
      %p208 = scmp.eq.s32.totalorder %s24, 0
      %p209 = por %p207, %p208
      %p210 = scmp.ne.s32.totalorder %s198, %s199
      %p211 = scmp.eq.s32.totalorder %s25, 1
      %p212 = por %p210, %p211
      %p214 = scmp.ne.s32.totalorder %s199, %s213
      %p215 = scmp.eq.s32.totalorder %s25, 0
      %p216 = por %p214, %p215
      %s218 = sadd.s32 %s217, 1
      %p221 = scmp.eq.s32.totalorder %s19, 1
      %p222 = scmp.ne.s32.totalorder %s217, %s219
      %p223 = scmp.eq.s32.totalorder %s19, 0
      %p224 = por %p222, %p223
      %p225 = scmp.ne.s32.totalorder %s217, %s219
      %p226 = scmp.eq.s32.totalorder %s24, 1
      %p227 = por %p225, %p226
      %p228 = scmp.ne.s32.totalorder %s219, %s220
      %p229 = scmp.eq.s32.totalorder %s24, 0
      %p230 = por %p228, %p229
      %p231 = scmp.ne.s32.totalorder %s219, %s220
      %p232 = scmp.eq.s32.totalorder %s25, 1
      %p233 = por %p231, %p232
      %p235 = scmp.ne.s32.totalorder %s220, %s234
      %p236 = scmp.eq.s32.totalorder %s25, 0
      %p237 = por %p235, %p236
      %s239 = sadd.s32 %s238, 1
      %p242 = scmp.eq.s32.totalorder %s19, 1
      %p243 = scmp.ne.s32.totalorder %s238, %s240
      %p244 = scmp.eq.s32.totalorder %s19, 0
      %p245 = por %p243, %p244
      %p246 = scmp.ne.s32.totalorder %s238, %s240
      %p247 = scmp.eq.s32.totalorder %s24, 1
      %p248 = por %p246, %p247
      %p249 = scmp.ne.s32.totalorder %s240, %s241
      %p250 = scmp.eq.s32.totalorder %s24, 0
      %p251 = por %p249, %p250
      %p252 = scmp.ne.s32.totalorder %s240, %s241
      %p253 = scmp.eq.s32.totalorder %s25, 1
      %p254 = por %p252, %p253
      %p256 = scmp.ne.s32.totalorder %s241, %s255
      %p257 = scmp.eq.s32.totalorder %s25, 0
      %p258 = por %p256, %p257
      %s259 = ssub.s32 %s26, %s38
      %s260 = ssub.s32 %s27, %s34
      %s261 = sor.u32 %s259, %s260
      %p262 = scmp.eq.s32.totalorder %s261, 0
      %s264 = sadd.s32 %s263, 1
      %s265 = scalar_select %p262, %s263, %s264
      %p268 = pneg %p262
      %p269 = scmp.eq.s32.totalorder %s19, 1
      %p270 = por %p268, %p269
      %p271 = scmp.ne.s32.totalorder %s263, %s266
      %p272 = scmp.eq.s32.totalorder %s19, 0
      %p273 = por %p271, %p272
      %p274 = scmp.ne.s32.totalorder %s263, %s266
      %p275 = scmp.eq.s32.totalorder %s24, 1
      %p276 = por %p274, %p275
      %p277 = scmp.ne.s32.totalorder %s266, %s267
      %p278 = scmp.eq.s32.totalorder %s24, 0
      %p279 = por %p277, %p278
      %p280 = scmp.ne.s32.totalorder %s266, %s267
      %p281 = scmp.eq.s32.totalorder %s25, 1
      %p282 = por %p280, %p281
      %p284 = scmp.ne.s32.totalorder %s267, %s283
      %p285 = scmp.eq.s32.totalorder %s25, 0
      %p286 = por %p284, %p285
      %p287 = scmp.le.s32.totalorder 1, %s19
      %p288 = scmp.lt.s32.totalorder %s19, 3
      %p289 = pnand %p287, %p288
      %p290 = pneg %p289
      // Predicated region
      $region9: #{tpu_custom_call.1} parent=5 // pred_check
        _
      $region10: #{tpu_custom_call.1} parent=5 // pred_check_branch
        %292 = sbr.rel (%p289) target = $region12
      $region11: #{tpu_custom_call.1} parent=5 // pred_region
        %s293 = ssub.s32 %s19, 1
        // Predicated region
        $region13: #{tpu_custom_call.1} parent=11 // pred_check
          %p294 = pneg %p104
        $region14: #{tpu_custom_call.1} parent=11 // pred_check_branch
          %296 = sbr.rel (%p294) target = $region16
        $region15: #{tpu_custom_call.1} parent=11 // pred_region
          _
        $region16: #{tpu_custom_call.1} parent=11 // pred_fallthru
          _
        // Predicated region
        $region17: #{tpu_custom_call.1} parent=11 // pred_check
          %p297 = pneg %p125
        $region18: #{tpu_custom_call.1} parent=11 // pred_check_branch
          %299 = sbr.rel (%p297) target = $region20
        $region19: #{tpu_custom_call.1} parent=11 // pred_region
          _
        $region20: #{tpu_custom_call.1} parent=11 // pred_fallthru
          _
        // Predicated region
        $region21: #{tpu_custom_call.1} parent=11 // pred_check
          %p300 = pneg %p146
        $region22: #{tpu_custom_call.1} parent=11 // pred_check_branch
          %302 = sbr.rel (%p300) target = $region24
        $region23: #{tpu_custom_call.1} parent=11 // pred_region
          _
        $region24: #{tpu_custom_call.1} parent=11 // pred_fallthru
          _
        // Predicated region
        $region25: #{tpu_custom_call.1} parent=11 // pred_check
          %p303 = pneg %p167
        $region26: #{tpu_custom_call.1} parent=11 // pred_check_branch
          %305 = sbr.rel (%p303) target = $region28
        $region27: #{tpu_custom_call.1} parent=11 // pred_region
          _
        $region28: #{tpu_custom_call.1} parent=11 // pred_fallthru
          _
        // Predicated region
        $region29: #{tpu_custom_call.1} parent=11 // pred_check
          %p306 = pneg %p188
        $region30: #{tpu_custom_call.1} parent=11 // pred_check_branch
          %308 = sbr.rel (%p306) target = $region32
        $region31: #{tpu_custom_call.1} parent=11 // pred_region
          _
        $region32: #{tpu_custom_call.1} parent=11 // pred_fallthru
          _
        // Predicated region
        $region33: #{tpu_custom_call.1} parent=11 // pred_check
          %p309 = pneg %p209
        $region34: #{tpu_custom_call.1} parent=11 // pred_check_branch
          %311 = sbr.rel (%p309) target = $region36
        $region35: #{tpu_custom_call.1} parent=11 // pred_region
          _
        $region36: #{tpu_custom_call.1} parent=11 // pred_fallthru
          _
        // Predicated region
        $region37: #{tpu_custom_call.1} parent=11 // pred_check
          %p312 = pneg %p230
        $region38: #{tpu_custom_call.1} parent=11 // pred_check_branch
          %314 = sbr.rel (%p312) target = $region40
        $region39: #{tpu_custom_call.1} parent=11 // pred_region
          _
        $region40: #{tpu_custom_call.1} parent=11 // pred_fallthru
          _
        // Predicated region
        $region41: #{tpu_custom_call.1} parent=11 // pred_check
          %p315 = pneg %p251
        $region42: #{tpu_custom_call.1} parent=11 // pred_check_branch
          %317 = sbr.rel (%p315) target = $region44
        $region43: #{tpu_custom_call.1} parent=11 // pred_region
          _
        $region44: #{tpu_custom_call.1} parent=11 // pred_fallthru
          _
      $region12: #{tpu_custom_call.1} parent=5 // pred_fallthru
        _
      %p318 = scmp.lt.s32.totalorder %s19, 2
      // Predicated region
      $region45: #{tpu_custom_call.1} parent=5 // pred_check
        %p319 = pneg %p318
      $region46: #{tpu_custom_call.1} parent=5 // pred_check_branch
        %321 = sbr.rel (%p319) target = $region48
      $region47: #{tpu_custom_call.1} parent=5 // pred_region
        // Predicated region
        $region49: #{tpu_custom_call.1} parent=47 // pred_check
          %p322 = pneg %p51
        $region50: #{tpu_custom_call.1} parent=47 // pred_check_branch
          %324 = sbr.rel (%p322) target = $region52
        $region51: #{tpu_custom_call.1} parent=47 // pred_region
          %p325 = scmp.lt.s32.totalorder %s26, 1
          %s326 = scalar_select %p325, %s26, 1
          %s327 = smul.addr %s326, 8
          %s328 = scalar_lea.vmem %s0, %s327
        $region52: #{tpu_custom_call.1} parent=47 // pred_fallthru
          _
        // Predicated region
        $region53: #{tpu_custom_call.1} parent=47 // pred_check
          %p329 = pneg %p77
        $region54: #{tpu_custom_call.1} parent=47 // pred_check_branch
          %331 = sbr.rel (%p329) target = $region56
        $region55: #{tpu_custom_call.1} parent=47 // pred_region
          %p332 = scmp.lt.s32.totalorder %s26, 1
          %s333 = scalar_select %p332, %s26, 1
          %s334 = scalar_lea.vmem %s1, %s333
        $region56: #{tpu_custom_call.1} parent=47 // pred_fallthru
          _
      $region48: #{tpu_custom_call.1} parent=5 // pred_fallthru
        _
      %p335 = scmp.le.s32.totalorder 1, %s19
      %p336 = scmp.lt.s32.totalorder %s19, 3
      %p337 = pnand %p335, %p336
      %p338 = pneg %p337
      // Predicated region
      $region57: #{tpu_custom_call.1} parent=5 // pred_check
        _
      $region58: #{tpu_custom_call.1} parent=5 // pred_check_branch
        %340 = sbr.rel (%p337) target = $region60
      $region59: #{tpu_custom_call.1} parent=5 // pred_region
        %s341 = ssub.s32 %s19, 1
        %p342 = scmp.lt.s32.totalorder %s28, 1
        %s343 = scalar_select %p342, %s28, 1
        %s344 = smul.addr %s343, 8
        %s345 = scalar_lea.vmem %s0, %s344
        %p346 = pneg %p57
        %p347 = pneg %p54
        %p348 = scmp.lt.s32.totalorder %s28, 1
        %s349 = scalar_select %p348, %s28, 1
        %s350 = scalar_lea.vmem %s1, %s349
        %p351 = pneg %p83
        %p352 = pneg %p80
        %p353 = pneg %p104
        %p354 = pneg %p101
        %p355 = pneg %p125
        %p356 = pneg %p122
        %p357 = pneg %p146
        %p358 = pneg %p143
        %p359 = pneg %p167
        %p360 = pneg %p164
        %p361 = pneg %p188
        %p362 = pneg %p185
        %p363 = pneg %p209
        %p364 = pneg %p206
        %p365 = pneg %p230
        %p366 = pneg %p227
        %p367 = pneg %p251
        %p368 = pneg %p248
        %p369 = pneg %p279
        %p370 = pneg %p276
        %s371 = sand.u32 %s266, 1
        %s372 = scalar_lea.sflag [#allocation7], %s371
        %s373 = sand.u32 %s266, 1
        %s374 = smul.addr %s373, 8
        %s375 = scalar_lea.vmem [#allocation6], %s374
        %p376 = scmp.lt.s32.totalorder %s28, 1
        %s377 = scalar_select %p376, %s28, 1
        %s378 = smul.addr %s377, 8
        %s379 = scalar_lea.vmem %s0, %s378
        %p380 = scmp.lt.s32.totalorder %s28, 1
        %s381 = scalar_select %p380, %s28, 1
        %s382 = scalar_lea.vmem %s1, %s381
        %p383 = scmp.eq.s32.totalorder %s29, 0
        // Predicated region
        $region61: #{tpu_custom_call.1} parent=59 // pred_check
          %p384 = pneg %p383
        $region62: #{tpu_custom_call.1} parent=59 // pred_check_branch
          %386 = sbr.rel (%p384) target = $region64
        $region63: #{tpu_custom_call.1} parent=59 // pred_region
          %v387 = vld [vmem:[%s382] sm:$0x1]
          %v388 = vsub.f32 1.0, %v387
          %v389 = vmul.f32 %v388, -1e+12
          %vm390 = vcmask 57344
          %391 = vst.msk [vmem:[#allocation5] sm:$0x1] %vm390, %v389
          %v392 = vsel %vm390, %v387, 0.0
          %393 = vadd.xlane.f32.xlu0 %v392
          %v394 = vpop.xlane.xlu0 %393
          %v395 = vmax.f32 %v394, 1.0
          %v396 = vlog2.pop %v395
          %v397 = vmul.f32 %v396, 0.6931472
          %v398 = vmul.f32 %v397, 0.16029945
          %v399 = vmul.f32 %v398, 0.125
          %v400 = vld [vmem:[%s379] sm:$0xff]
          %v401 = vld [vmem:[%s4] sm:$0xff]
          %v402 = vld [vmem:[%s4 + $0x8] sm:$0xff]
          %v403 = vld [vmem:[%s4 + $0x10] sm:$0xff]
          %v404 = vld [vmem:[%s4 + $0x18] sm:$0xff]
          %v405 = vld [vmem:[%s4 + $0x20] sm:$0xff]
          %v406 = vld [vmem:[%s4 + $0x28] sm:$0xff]
          %v407 = vld [vmem:[%s4 + $0x30] sm:$0xff]
          %v408 = vld [vmem:[%s4 + $0x38] sm:$0xff]
          %v409 = vld [vmem:[%s5] sm:$0x3]
          %v411 = vlaneseq
          %v412 = vshrl.u32 %v411, 7
          %v413 = vsub.s32 0, %v412
          %v414 = vrot.slane %v409, %v413
          %v415 = vlaneseq
          %v416 = vshrl.u32 %v415, 7
          %v417 = vsub.s32 1, %v416
          %v418 = vrot.slane %v409, %v417
          %vm421 = vcmask 261120
          %v423 = vsel %vm421, %v400, 0
          %425 = vmatprep.subr.mxu0 %v402
          %426 = vmatpush1.msra.mxu0 %v401
          %427 = vmatprep.subr.mxu0 %v404
          %428 = vmatpush1.msra.mxu0 %v403
          %429 = vmatprep.subr.mxu0 %v406
          %430 = vmatpush1.msra.mxu0 %v405
          %431 = vmatprep.subr.mxu0 %v408
          %432 = vmatpush1.msra.mxu0 %v407
          %433 = vmatprep.subr.mxu0 0.0
          %434 = vmatpush1.msra.mxu0 0.0
          %435 = vmatprep.subr.mxu0 0.0
          %436 = vmatpush1.msra.mxu0 0.0
          %437 = vmatprep.subr.mxu0 0.0
          %438 = vmatpush1.msra.mxu0 0.0
          %439 = vmatprep.subr.mxu0 0.0
          %440 = vmatpush1.msra.mxu0 0.0
          %441 = vmatprep.subr.mxu0 0.0
          %442 = vmatpush1.msra.mxu0 0.0
          %443 = vmatprep.subr.mxu0 0.0
          %444 = vmatpush1.msra.mxu0 0.0
          %445 = vmatprep.subr.mxu0 0.0
          %446 = vmatpush1.msra.mxu0 0.0
          %447 = vmatprep.subr.mxu0 0.0
          %448 = vmatpush1.msra.mxu0 0.0
          %449 = vmatprep.subr.mxu0 0.0
          %450 = vmatpush1.msra.mxu0 0.0
          %451 = vmatprep.subr.mxu0 0.0
          %452 = vmatpush1.msra.mxu0 0.0
          %453 = vmatprep.subr.mxu0 0.0
          %454 = vmatpush1.msra.mxu0 0.0
          %455 = vmatprep.subr.mxu0 0.0
          %456 = vmatpush1.msra.mxu0 0.0
          %457 = vmatprep.subr.mxu0 0.0
          %458 = vmatpush1.msra.mxu0 0.0
          %459 = vmatprep.subr.mxu0 0.0
          %460 = vmatpush1.msra.mxu0 0.0
          %461 = vmatprep.subr.mxu0 0.0
          %462 = vmatpush1.msra.mxu0 0.0
          %463 = vmatprep.subr.mxu0 0.0
          %464 = vmatpush1.msra.mxu0 0.0
          %465 = vmatprep.subr.mxu0 0.0
          %466 = vmatpush1.msra.mxu0 0.0
          %467 = vmatprep.subr.mxu0 0.0
          %468 = vmatpush1.msra.mxu0 0.0
          %469 = vmatprep.subr.mxu0 0.0
          %470 = vmatpush1.msra.mxu0 0.0
          %471 = vmatprep.subr.mxu0 0.0
          %472 = vmatpush1.msra.mxu0 0.0
          %473 = vmatprep.subr.mxu0 0.0
          %474 = vmatpush1.msra.mxu0 0.0
          %475 = vmatprep.subr.mxu0 0.0
          %476 = vmatpush1.msra.mxu0 0.0
          %477 = vmatprep.subr.mxu0 0.0
          %478 = vmatpush1.msra.mxu0 0.0
          %479 = vmatprep.subr.mxu0 0.0
          %480 = vmatpush1.msra.mxu0 0.0
          %481 = vmatprep.subr.mxu0 0.0
          %482 = vmatpush1.msra.mxu0 0.0
          %483 = vmatprep.subr.mxu0 0.0
          %484 = vmatpush1.msra.mxu0 0.0
          %485 = vmatprep.subr.mxu0 0.0
          %486 = vmatpush1.msra.mxu0 0.0
          %487 = vmatprep.subr.mxu0 0.0
          %488 = vmatpush1.msra.mxu0 0.0
          %489 = vmatprep.mubr.f32.mxu0 0.0
          %490 = vmatmul.mubr.f32.gmra.mrb[0].mxu0 %v423
          %v491 = vpop.f32.mrb[0].mxu0
          %v492 = vadd.f32 %v414, %v491
          %v493 = vpop.f32.mrb[0].mxu0
          %v494 = vadd.f32 %v418, %v493
          %495 = vdwg.mxu0
          %v496 = vxor.u32 %v492, 2147483648
          %v497 = vxor.u32 %v494, 2147483648
          %v498 = vmul.f32 %v496, 1.442695
          %v499 = vpow.pop %v498
          %v500 = vmul.f32 %v497, 1.442695
          %v501 = vpow.pop %v500
          %v502 = vadd.f32 %v499, 1.0
          %v503 = vadd.f32 %v501, 1.0
          %v504 = vrcp.pop %v502
          %v505 = vmul.f32 1.0, %v504
          %v506 = vrcp.pop %v503
          %v507 = vmul.f32 1.0, %v506
          %v508 = vmul.f32 %v492, %v505
          %v509 = vmul.f32 %v494, %v507
          %v510 = vld [vmem:[%s6] sm:$0x3]
          %v511 = vld [vmem:[%s7] sm:$0x3]
          %512 = vst [vmem:[#allocation3] sm:$0xff] %v508
          %v513 = vlaneseq
          %v514 = vshrl.u32 %v513, 7
          %v515 = vsub.s32 1, %v514
          %v516 = vrot.slane %v510, %v515
          %v517 = vmul.f32 %v509, %v516
          %v518 = vlaneseq
          %v519 = vshrl.u32 %v518, 7
          %v520 = vsub.s32 1, %v519
          %v521 = vrot.slane %v511, %v520
          %v522 = vadd.f32 %v517, %v521
          %vm523 = vcmask 523264
          %524 = vst.msk [vmem:[#allocation2] sm:$0xff] %vm523, %v522
          %v525 = vlaneseq
          %v526 = vshrl.u32 %v525, 7
          %v527 = vsub.s32 0, %v526
          %v528 = vrot.slane %v510, %v527
          %v529 = vmul.f32 %v509, %v528
          %v530 = vlaneseq
          %v531 = vshrl.u32 %v530, 7
          %v532 = vsub.s32 0, %v531
          %v533 = vrot.slane %v511, %v532
          %v534 = vadd.f32 %v529, %v533
          %v535 = vlaneseq
          %v536 = vshrl.u32 %v535, 7
          %v537 = vsub.s32 0, %v536
          %v538 = vrot.slane %v399, %v537
          %v539 = vmul.f32 %v534, %v538
          %540 = vst.msk [vmem:[#allocation4] sm:$0xff] %vm523, %v539
        $region64: #{tpu_custom_call.1} parent=59 // pred_fallthru
          _
        %s541 = smul.u32 %s29, 8
        %s542 = scalar_lea.vmem %s379, %s541
        %v543 = vld [vmem:[%s542] sm:$0xff]
        %v544 = vld [vmem:[%s2] sm:$0xff]
        %v545 = vld [vmem:[%s2 + $0x8] sm:$0xff]
        %v546 = vld [vmem:[%s2 + $0x10] sm:$0xff]
        %v547 = vld [vmem:[%s2 + $0x18] sm:$0xff]
        %v548 = vld [vmem:[%s3] sm:$0x1]
        %v550 = vlaneseq
        %v551 = vshrl.u32 %v550, 7
        %v552 = vsub.s32 0, %v551
        %v553 = vrot.slane %v548, %v552
        %vm555 = vcmask 261120
        %v557 = vsel %vm555, %v543, 0
        %559 = vmatprep.subr.mxu0 0.0
        %560 = vmatpush1.msra.mxu0 %v544
        %561 = vmatprep.subr.mxu0 0.0
        %562 = vmatpush1.msra.mxu0 %v545
        %563 = vmatprep.subr.mxu0 0.0
        %564 = vmatpush1.msra.mxu0 %v546
        %565 = vmatprep.subr.mxu0 0.0
        %566 = vmatpush1.msra.mxu0 %v547
        %567 = vmatprep.subr.mxu0 0.0
        %568 = vmatpush1.msra.mxu0 0.0
        %569 = vmatprep.subr.mxu0 0.0
        %570 = vmatpush1.msra.mxu0 0.0
        %571 = vmatprep.subr.mxu0 0.0
        %572 = vmatpush1.msra.mxu0 0.0
        %573 = vmatprep.subr.mxu0 0.0
        %574 = vmatpush1.msra.mxu0 0.0
        %575 = vmatprep.subr.mxu0 0.0
        %576 = vmatpush1.msra.mxu0 0.0
        %577 = vmatprep.subr.mxu0 0.0
        %578 = vmatpush1.msra.mxu0 0.0
        %579 = vmatprep.subr.mxu0 0.0
        %580 = vmatpush1.msra.mxu0 0.0
        %581 = vmatprep.subr.mxu0 0.0
        %582 = vmatpush1.msra.mxu0 0.0
        %583 = vmatprep.subr.mxu0 0.0
        %584 = vmatpush1.msra.mxu0 0.0
        %585 = vmatprep.subr.mxu0 0.0
        %586 = vmatpush1.msra.mxu0 0.0
        %587 = vmatprep.subr.mxu0 0.0
        %588 = vmatpush1.msra.mxu0 0.0
        %589 = vmatprep.subr.mxu0 0.0
        %590 = vmatpush1.msra.mxu0 0.0
        %591 = vmatprep.subr.mxu0 0.0
        %592 = vmatpush1.msra.mxu0 0.0
        %593 = vmatprep.subr.mxu0 0.0
        %594 = vmatpush1.msra.mxu0 0.0
        %595 = vmatprep.subr.mxu0 0.0
        %596 = vmatpush1.msra.mxu0 0.0
        %597 = vmatprep.subr.mxu0 0.0
        %598 = vmatpush1.msra.mxu0 0.0
        %599 = vmatprep.subr.mxu0 0.0
        %600 = vmatpush1.msra.mxu0 0.0
        %601 = vmatprep.subr.mxu0 0.0
        %602 = vmatpush1.msra.mxu0 0.0
        %603 = vmatprep.subr.mxu0 0.0
        %604 = vmatpush1.msra.mxu0 0.0
        %605 = vmatprep.subr.mxu0 0.0
        %606 = vmatpush1.msra.mxu0 0.0
        %607 = vmatprep.subr.mxu0 0.0
        %608 = vmatpush1.msra.mxu0 0.0
        %609 = vmatprep.subr.mxu0 0.0
        %610 = vmatpush1.msra.mxu0 0.0
        %611 = vmatprep.subr.mxu0 0.0
        %612 = vmatpush1.msra.mxu0 0.0
        %613 = vmatprep.subr.mxu0 0.0
        %614 = vmatpush1.msra.mxu0 0.0
        %615 = vmatprep.subr.mxu0 0.0
        %616 = vmatpush1.msra.mxu0 0.0
        %617 = vmatprep.subr.mxu0 0.0
        %618 = vmatpush1.msra.mxu0 0.0
        %619 = vmatprep.subr.mxu0 0.0
        %620 = vmatpush1.msra.mxu0 0.0
        %621 = vmatprep.subr.mxu0 0.0
        %622 = vmatpush1.msra.mxu0 0.0
        %623 = vmatprep.mubr.f32.mxu0 0.0
        %624 = vmatmul.mubr.f32.gmra.mrb[0].mxu0 %v557
        %v625 = vpop.f32.mrb[0].mxu0
        %v626 = vadd.f32 %v553, %v625
        %v627 = vpop.f32.mrb[0].mxu0
        %628 = vdwg.mxu0
        %v629 = vxor.u32 %v626, 2147483648
        %v630 = vmul.f32 %v629, 1.442695
        %v631 = vpow.pop %v630
        %v632 = vadd.f32 %v631, 1.0
        %v633 = vrcp.pop %v632
        %v634 = vmul.f32 1.0, %v633
        %v635 = vmul.f32 %v626, %v634
        %s636 = scalar_lea.vmem [#allocation4], %s541
        %v637 = vld [vmem:[%s636] sm:$0xff]
        %v638 = vld [vmem:[#allocation2] sm:$0xff]
        %v639 = vld [vmem:[#allocation5] sm:$0x1]
        %v641 = vlaneseq
        %v642 = vshrl.u32 %v641, 7
        %v643 = vsub.s32 0, %v642
        %v644 = vrot.slane %v639, %v643
        %vm646 = vcmask 523264
        %v648 = vsel %vm646, %v637, 0
        %v651 = vsel %vm646, %v638, 0
        %653 = vmatprep.subr.mxu0 0.0
        %654 = vmatpush1.xpose.msra.mxu0 %v651
        %655 = vmatprep.subr.mxu0 0.0
        %656 = vmatpush1.xpose.msra.mxu0 0.0
        %657 = vmatprep.subr.mxu0 0.0
        %658 = vmatpush1.xpose.msra.mxu0 0.0
        %659 = vmatprep.subr.mxu0 0.0
        %660 = vmatpush1.xpose.msra.mxu0 0.0
        %661 = vmatprep.subr.mxu0 0.0
        %662 = vmatpush1.xpose.msra.mxu0 0.0
        %663 = vmatprep.subr.mxu0 0.0
        %664 = vmatpush1.xpose.msra.mxu0 0.0
        %665 = vmatprep.subr.mxu0 0.0
        %666 = vmatpush1.xpose.msra.mxu0 0.0
        %667 = vmatprep.subr.mxu0 0.0
        %668 = vmatpush1.xpose.msra.mxu0 0.0
        %669 = vmatprep.subr.mxu0 0.0
        %670 = vmatpush1.xpose.msra.mxu0 0.0
        %671 = vmatprep.subr.mxu0 0.0
        %672 = vmatpush1.xpose.msra.mxu0 0.0
        %673 = vmatprep.subr.mxu0 0.0
        %674 = vmatpush1.xpose.msra.mxu0 0.0
        %675 = vmatprep.subr.mxu0 0.0
        %676 = vmatpush1.xpose.msra.mxu0 0.0
        %677 = vmatprep.subr.mxu0 0.0
        %678 = vmatpush1.xpose.msra.mxu0 0.0
        %679 = vmatprep.subr.mxu0 0.0
        %680 = vmatpush1.xpose.msra.mxu0 0.0
        %681 = vmatprep.subr.mxu0 0.0
        %682 = vmatpush1.xpose.msra.mxu0 0.0
        %683 = vmatprep.subr.mxu0 0.0
        %684 = vmatpush1.xpose.msra.mxu0 0.0
        %685 = vmatprep.subr.mxu0 0.0
        %686 = vmatpush1.xpose.msra.mxu0 0.0
        %687 = vmatprep.subr.mxu0 0.0
        %688 = vmatpush1.xpose.msra.mxu0 0.0
        %689 = vmatprep.subr.mxu0 0.0
        %690 = vmatpush1.xpose.msra.mxu0 0.0
        %691 = vmatprep.subr.mxu0 0.0
        %692 = vmatpush1.xpose.msra.mxu0 0.0
        %693 = vmatprep.subr.mxu0 0.0
        %694 = vmatpush1.xpose.msra.mxu0 0.0
        %695 = vmatprep.subr.mxu0 0.0
        %696 = vmatpush1.xpose.msra.mxu0 0.0
        %697 = vmatprep.subr.mxu0 0.0
        %698 = vmatpush1.xpose.msra.mxu0 0.0
        %699 = vmatprep.subr.mxu0 0.0
        %700 = vmatpush1.xpose.msra.mxu0 0.0
        %701 = vmatprep.subr.mxu0 0.0
        %702 = vmatpush1.xpose.msra.mxu0 0.0
        %703 = vmatprep.subr.mxu0 0.0
        %704 = vmatpush1.xpose.msra.mxu0 0.0
        %705 = vmatprep.subr.mxu0 0.0
        %706 = vmatpush1.xpose.msra.mxu0 0.0
        %707 = vmatprep.subr.mxu0 0.0
        %708 = vmatpush1.xpose.msra.mxu0 0.0
        %709 = vmatprep.subr.mxu0 0.0
        %710 = vmatpush1.xpose.msra.mxu0 0.0
        %711 = vmatprep.subr.mxu0 0.0
        %712 = vmatpush1.xpose.msra.mxu0 0.0
        %713 = vmatprep.subr.mxu0 0.0
        %714 = vmatpush1.xpose.msra.mxu0 0.0
        %715 = vmatprep.subr.mxu0 0.0
        %716 = vmatpush1.xpose.msra.mxu0 0.0
        %717 = vmatprep.mubr.f32.mxu0 0.0
        %718 = vmatmul.mubr.f32.gmra.mrb[0].mxu0 %v648
        %v719 = vpop.f32.mrb[0].mxu0
        %v720 = vadd.f32 %v644, %v719
        %v721 = vpop.f32.mrb[0].mxu0
        %722 = vdwg.mxu0
        %vm723 = vcmask 64512
        %v724 = vsel %vm723, %v720, -inf
        %725 = vmax.xlane.f32.xlu0 %v724
        %v726 = vpop.xlane.xlu0 %725
        %v727 = vsub.f32 %v720, %v726
        %v728 = vmul.f32 %v727, 1.442695
        %v729 = vpow.pop %v728
        %v730 = vsel %vm723, %v729, 0.0
        %731 = vadd.xlane.f32.xlu0 %v730
        %v732 = vpop.xlane.xlu0 %731
        %v733 = vrcp.pop %v732
        %v734 = vmul.f32 %v729, %v733
        %v735 = vld [vmem:[#allocation3] sm:$0xff]
        %v737 = vsel %vm723, %v734, 0
        %739 = vmatprep.subr.mxu0 0.0
        %740 = vmatpush1.msra.mxu0 %v735
        %741 = vmatprep.subr.mxu0 0.0
        %742 = vmatpush1.msra.mxu0 0.0
        %743 = vmatprep.subr.mxu0 0.0
        %744 = vmatpush1.msra.mxu0 0.0
        %745 = vmatprep.subr.mxu0 0.0
        %746 = vmatpush1.msra.mxu0 0.0
        %747 = vmatprep.subr.mxu0 0.0
        %748 = vmatpush1.msra.mxu0 0.0
        %749 = vmatprep.subr.mxu0 0.0
        %750 = vmatpush1.msra.mxu0 0.0
        %751 = vmatprep.subr.mxu0 0.0
        %752 = vmatpush1.msra.mxu0 0.0
        %753 = vmatprep.subr.mxu0 0.0
        %754 = vmatpush1.msra.mxu0 0.0
        %755 = vmatprep.subr.mxu0 0.0
        %756 = vmatpush1.msra.mxu0 0.0
        %757 = vmatprep.subr.mxu0 0.0
        %758 = vmatpush1.msra.mxu0 0.0
        %759 = vmatprep.subr.mxu0 0.0
        %760 = vmatpush1.msra.mxu0 0.0
        %761 = vmatprep.subr.mxu0 0.0
        %762 = vmatpush1.msra.mxu0 0.0
        %763 = vmatprep.subr.mxu0 0.0
        %764 = vmatpush1.msra.mxu0 0.0
        %765 = vmatprep.subr.mxu0 0.0
        %766 = vmatpush1.msra.mxu0 0.0
        %767 = vmatprep.subr.mxu0 0.0
        %768 = vmatpush1.msra.mxu0 0.0
        %769 = vmatprep.subr.mxu0 0.0
        %770 = vmatpush1.msra.mxu0 0.0
        %771 = vmatprep.subr.mxu0 0.0
        %772 = vmatpush1.msra.mxu0 0.0
        %773 = vmatprep.subr.mxu0 0.0
        %774 = vmatpush1.msra.mxu0 0.0
        %775 = vmatprep.subr.mxu0 0.0
        %776 = vmatpush1.msra.mxu0 0.0
        %777 = vmatprep.subr.mxu0 0.0
        %778 = vmatpush1.msra.mxu0 0.0
        %779 = vmatprep.subr.mxu0 0.0
        %780 = vmatpush1.msra.mxu0 0.0
        %781 = vmatprep.subr.mxu0 0.0
        %782 = vmatpush1.msra.mxu0 0.0
        %783 = vmatprep.subr.mxu0 0.0
        %784 = vmatpush1.msra.mxu0 0.0
        %785 = vmatprep.subr.mxu0 0.0
        %786 = vmatpush1.msra.mxu0 0.0
        %787 = vmatprep.subr.mxu0 0.0
        %788 = vmatpush1.msra.mxu0 0.0
        %789 = vmatprep.subr.mxu0 0.0
        %790 = vmatpush1.msra.mxu0 0.0
        %791 = vmatprep.subr.mxu0 0.0
        %792 = vmatpush1.msra.mxu0 0.0
        %793 = vmatprep.subr.mxu0 0.0
        %794 = vmatpush1.msra.mxu0 0.0
        %795 = vmatprep.subr.mxu0 0.0
        %796 = vmatpush1.msra.mxu0 0.0
        %797 = vmatprep.subr.mxu0 0.0
        %798 = vmatpush1.msra.mxu0 0.0
        %799 = vmatprep.subr.mxu0 0.0
        %800 = vmatpush1.msra.mxu0 0.0
        %801 = vmatprep.subr.mxu0 0.0
        %802 = vmatpush1.msra.mxu0 0.0
        %803 = vmatprep.mubr.f32.mxu0 0.0
        %804 = vmatmul.mubr.f32.gmra.mrb[0].mxu0 %v737
        %v805 = vpop.f32.mrb[0].mxu0
        %v806 = vadd.f32 0.0, %v805
        %v807 = vpop.f32.mrb[0].mxu0
        %808 = vdwg.mxu0
        %v809 = vmul.f32 %v635, %v806
        %v810 = vld [vmem:[%s8] sm:$0xff]
        %v811 = vld [vmem:[%s8 + $0x8] sm:$0xff]
        %v812 = vld [vmem:[%s8 + $0x10] sm:$0xff]
        %v813 = vld [vmem:[%s8 + $0x18] sm:$0xff]
        %v814 = vld [vmem:[%s8 + $0x20] sm:$0xff]
        %v815 = vld [vmem:[%s8 + $0x28] sm:$0xff]
        %v816 = vld [vmem:[%s8 + $0x30] sm:$0xff]
        %v817 = vld [vmem:[%s8 + $0x38] sm:$0xff]
        %v818 = vld [vmem:[%s8 + $0x40] sm:$0xff]
        %v819 = vld [vmem:[%s8 + $0x48] sm:$0xff]
        %v820 = vld [vmem:[%s8 + $0x50] sm:$0xff]
        %v821 = vld [vmem:[%s8 + $0x58] sm:$0xff]
        %v822 = vld [vmem:[%s8 + $0x60] sm:$0xff]
        %v823 = vld [vmem:[%s8 + $0x68] sm:$0xff]
        %v824 = vld [vmem:[%s8 + $0x70] sm:$0xff]
        %v825 = vld [vmem:[%s8 + $0x78] sm:$0xff]
        %v826 = vld [vmem:[%s9] sm:$0x1]
        %v828 = vlaneseq
        %v829 = vshrl.u32 %v828, 7
        %v830 = vsub.s32 0, %v829
        %v831 = vrot.slane %v826, %v830
        %833 = vmatprep.subr.mxu0 0.0
        %834 = vmatpush1.msra.mxu0 %v810
        %835 = vmatprep.subr.mxu0 0.0
        %836 = vmatpush1.msra.mxu0 %v811
        %837 = vmatprep.subr.mxu0 0.0
        %838 = vmatpush1.msra.mxu0 %v812
        %839 = vmatprep.subr.mxu0 0.0
        %840 = vmatpush1.msra.mxu0 %v813
        %841 = vmatprep.subr.mxu0 0.0
        %842 = vmatpush1.msra.mxu0 %v814
        %843 = vmatprep.subr.mxu0 0.0
        %844 = vmatpush1.msra.mxu0 %v815
        %845 = vmatprep.subr.mxu0 0.0
        %846 = vmatpush1.msra.mxu0 %v816
        %847 = vmatprep.subr.mxu0 0.0
        %848 = vmatpush1.msra.mxu0 %v817
        %849 = vmatprep.subr.mxu0 0.0
        %850 = vmatpush1.msra.mxu0 %v818
        %851 = vmatprep.subr.mxu0 0.0
        %852 = vmatpush1.msra.mxu0 %v819
        %853 = vmatprep.subr.mxu0 0.0
        %854 = vmatpush1.msra.mxu0 %v820
        %855 = vmatprep.subr.mxu0 0.0
        %856 = vmatpush1.msra.mxu0 %v821
        %857 = vmatprep.subr.mxu0 0.0
        %858 = vmatpush1.msra.mxu0 %v822
        %859 = vmatprep.subr.mxu0 0.0
        %860 = vmatpush1.msra.mxu0 %v823
        %861 = vmatprep.subr.mxu0 0.0
        %862 = vmatpush1.msra.mxu0 %v824
        %863 = vmatprep.subr.mxu0 0.0
        %864 = vmatpush1.msra.mxu0 %v825
        %865 = vmatprep.subr.mxu0 0.0
        %866 = vmatpush1.msra.mxu0 0.0
        %867 = vmatprep.subr.mxu0 0.0
        %868 = vmatpush1.msra.mxu0 0.0
        %869 = vmatprep.subr.mxu0 0.0
        %870 = vmatpush1.msra.mxu0 0.0
        %871 = vmatprep.subr.mxu0 0.0
        %872 = vmatpush1.msra.mxu0 0.0
        %873 = vmatprep.subr.mxu0 0.0
        %874 = vmatpush1.msra.mxu0 0.0
        %875 = vmatprep.subr.mxu0 0.0
        %876 = vmatpush1.msra.mxu0 0.0
        %877 = vmatprep.subr.mxu0 0.0
        %878 = vmatpush1.msra.mxu0 0.0
        %879 = vmatprep.subr.mxu0 0.0
        %880 = vmatpush1.msra.mxu0 0.0
        %881 = vmatprep.subr.mxu0 0.0
        %882 = vmatpush1.msra.mxu0 0.0
        %883 = vmatprep.subr.mxu0 0.0
        %884 = vmatpush1.msra.mxu0 0.0
        %885 = vmatprep.subr.mxu0 0.0
        %886 = vmatpush1.msra.mxu0 0.0
        %887 = vmatprep.subr.mxu0 0.0
        %888 = vmatpush1.msra.mxu0 0.0
        %889 = vmatprep.subr.mxu0 0.0
        %890 = vmatpush1.msra.mxu0 0.0
        %891 = vmatprep.subr.mxu0 0.0
        %892 = vmatpush1.msra.mxu0 0.0
        %893 = vmatprep.subr.mxu0 0.0
        %894 = vmatpush1.msra.mxu0 0.0
        %895 = vmatprep.subr.mxu0 0.0
        %896 = vmatpush1.msra.mxu0 0.0
        %897 = vmatprep.mubr.f32.mxu0 0.0
        %898 = vmatmul.mubr.f32.gmra.mrb[0].mxu0 %v809
        %v899 = vpop.f32.mrb[0].mxu0
        %v900 = vadd.f32 %v831, %v899
        %v901 = vpop.f32.mrb[0].mxu0
        %902 = vdwg.mxu0
        %903 = vst.msk [vmem:[%s375] sm:$0xff] %vm555, %v900
        %s904 = sand.u32 %s266, 1
        %s905 = scalar_lea.sflag [#allocation7], %s904
        %s906 = sand.u32 %s266, 1
        %s907 = smul.addr %s906, 8
        %s908 = scalar_lea.vmem [#allocation6], %s907
        // Predicated region
        $region65: #{tpu_custom_call.1} parent=59 // pred_check
          %p909 = pneg %p276
        $region66: #{tpu_custom_call.1} parent=59 // pred_check_branch
          %911 = sbr.rel (%p909) target = $region68
        $region67: #{tpu_custom_call.1} parent=59 // pred_region
          %s913 = ssub.s32 128, 128
          %914 = vsyncadd %s905, %s913
          %s915 = sadd.s32 %s29, %s28
          %s916 = smul.addr %s915, 128
          %s917 = scalar_lea.hbm %s10, %s916
          %s919 = sshll.u32 %s908, 4
          %s920 = int_to_ptr.vmem [resolvable:$true] %s919
          %922 = dma.vmem_to_hbm [thread:$0]  %s920, 128, %s917, %s905
        $region68: #{tpu_custom_call.1} parent=59 // pred_fallthru
          _
      $region60: #{tpu_custom_call.1} parent=5 // pred_fallthru
        _
      %p923 = scmp.le.s32.totalorder 2, %s19
      // Predicated region
      $region69: #{tpu_custom_call.1} parent=5 // pred_check
        %p924 = pneg %p923
      $region70: #{tpu_custom_call.1} parent=5 // pred_check_branch
        %926 = sbr.rel (%p924) target = $region72
      $region71: #{tpu_custom_call.1} parent=5 // pred_region
        %s927 = ssub.s32 %s19, 2
        // Predicated region
        $region73: #{tpu_custom_call.1} parent=71 // pred_check
          %p928 = pneg %p282
        $region74: #{tpu_custom_call.1} parent=71 // pred_check_branch
          %930 = sbr.rel (%p928) target = $region76
        $region75: #{tpu_custom_call.1} parent=71 // pred_region
          %s931 = sand.u32 %s267, 1
          %s932 = scalar_lea.sflag [#allocation7], %s931
          %s933 = sand.u32 %s267, 1
          %s934 = smul.addr %s933, 8
          %s935 = scalar_lea.vmem [#allocation6], %s934
          %936 = dma.done %s932, 128
        $region76: #{tpu_custom_call.1} parent=71 // pred_fallthru
          _
      $region72: #{tpu_custom_call.1} parent=5 // pred_fallthru
        _
    $region6: #{tpu_custom_call.1} parent=1 // loop_footer
      %s23 = sadd.s32 1, %s19
    $region7: #{tpu_custom_call.1} parent=1 // loop_footer_branch
      %18 = sbr.rel target = $region3
    $region8: #{tpu_custom_call.1} parent=1 // loop_exit
      _
    %937 = vsyncpa [#allocation7], 1
    %s938 = scalar_lea.sflag [#allocation7], 1
    %939 = vsyncpa %s938, 1

// kernel: tpu_custom_call.1
$region0: #{tpu_custom_call.1}
  #allocation0 [shape = 'u32[]', space=smem, size = 0x4, offset = 0x4, fixed_abs, tag = 'smem constant byte address 0x4 - core index']
  #allocation1 [shape = 'u32[144,128]{1,0:T(1,128)}', space=vmem, size = 0x12000, scoped, tag = 'internal scratch']
  #allocation2 [shape = 'f32[8,64]{1,0:T(8,128)}', space=vmem, size = 0x1000, scoped, tag = 'scratch operand']
  #allocation3 [shape = 'f32[8,128]{1,0:T(8,128)}', space=vmem, size = 0x1000, scoped, tag = 'scratch operand']
  #allocation4 [shape = 'f32[8,64]{1,0:T(8,128)}', space=vmem, size = 0x1000, scoped, tag = 'scratch operand']
  #allocation5 [shape = 'f32[1,8]{1,0:T(1,128)}', space=vmem, size = 0x200, scoped, tag = 'scratch operand']
  %s0 = inlined_call_operand.vmem [shape: f32[2,8,32], index: 0, kind: input, shape index: {}]
  %s1 = inlined_call_operand.vmem [shape: f32[2,1,1,8], index: 1, kind: input, shape index: {}]
  %s2 = inlined_call_operand.vmem [shape: f32[32,128], index: 2, kind: input, shape index: {}]
  %s3 = inlined_call_operand.vmem [shape: f32[1,128], index: 3, kind: input, shape index: {}]
  %s4 = inlined_call_operand.vmem [shape: f32[32,192], index: 4, kind: input, shape index: {}]
  %s5 = inlined_call_operand.vmem [shape: f32[1,192], index: 5, kind: input, shape index: {}]
  %s6 = inlined_call_operand.vmem [shape: f32[2,64], index: 6, kind: input, shape index: {}]
  %s7 = inlined_call_operand.vmem [shape: f32[2,64], index: 7, kind: input, shape index: {}]
  %s8 = inlined_call_operand.vmem [shape: f32[128,32], index: 8, kind: input, shape index: {}]
  %s9 = inlined_call_operand.vmem [shape: f32[1,32], index: 9, kind: input, shape index: {}]
  %s10 = inlined_call_operand.hbm [shape: f32[2,8,32], index: 10, kind: output, shape index: {}]
  %s11 = sld [smem:[#allocation0]]
  $region77: #{tpu_custom_call.1} parent=0
    _
  %s13 = ssub.s32 1, %s11
  %s14 = scalar_select 0, %s13, %s11
  $region1: #{tpu_custom_call.1} parent=0
    #allocation6 [shape = 'u8[8192]{0}', space=vmem, size = 0x2000, scoped, tag = 'output window, operand 0']
    #allocation7 [shape = 's32[2]{0}', space=sflag, size = 0x8, scoped, tag = 'scoped memory for tpu_custom_call.1']
    %15 = vsyncpa [#allocation7], 0
    %s16 = scalar_lea.sflag [#allocation7], 1
    %17 = vsyncpa %s16, 0
    loop: start=0, step=1, limit=4
    $region2: #{tpu_custom_call.1} parent=1 // loop_pre_header
      _
    $region3: #{tpu_custom_call.1} parent=1 // loop_header
      %s19 = sphi 0, %s23
      %p20 = scmp.ge.s32.totalorder %s19, 4
      %s26 = sphi 0, %s38
      %s27 = sphi 0, %s34
      %s28 = sphi 0, %s26
      %s29 = sphi 0, %s27
      %s30 = sphi 0, %s28
      %s31 = sphi 0, %s29
      %s41 = sphi 0, %s43
      %s44 = sphi 0, %s41
      %s45 = sphi 0, %s44
      %s61 = sphi 0, %s45
      %s67 = sphi 0, %s69
      %s70 = sphi 0, %s67
      %s71 = sphi 0, %s70
      %s87 = sphi 0, %s71
      %s91 = sphi 0, %s91
      %s93 = sphi 0, %s91
      %s94 = sphi 0, %s93
      %s108 = sphi 0, %s94
      %s112 = sphi 0, %s112
      %s114 = sphi 0, %s112
      %s115 = sphi 0, %s114
      %s129 = sphi 0, %s115
      %s133 = sphi 0, %s133
      %s135 = sphi 0, %s133
      %s136 = sphi 0, %s135
      %s150 = sphi 0, %s136
      %s154 = sphi 0, %s154
      %s156 = sphi 0, %s154
      %s157 = sphi 0, %s156
      %s171 = sphi 0, %s157
      %s175 = sphi 0, %s175
      %s177 = sphi 0, %s175
      %s178 = sphi 0, %s177
      %s192 = sphi 0, %s178
      %s196 = sphi 0, %s196
      %s198 = sphi 0, %s196
      %s199 = sphi 0, %s198
      %s213 = sphi 0, %s199
      %s217 = sphi 0, %s217
      %s219 = sphi 0, %s217
      %s220 = sphi 0, %s219
      %s234 = sphi 0, %s220
      %s238 = sphi 0, %s238
      %s240 = sphi 0, %s238
      %s241 = sphi 0, %s240
      %s255 = sphi 0, %s241
      %s263 = sphi 0, %s265
      %s266 = sphi 0, %s263
      %s267 = sphi 0, %s266
      %s283 = sphi 0, %s267
    $region4: #{tpu_custom_call.1} parent=1 // loop_header_branch
      %22 = sbr.rel (%p20) target = $region8
    $region5: #{tpu_custom_call.1} parent=1 // loop_body
      %s24 = ssub.s32 %s19, 1
      %s25 = ssub.s32 %s19, 2
      %s32 = sadd.s32 1, %s27
      %p33 = scmp.ge.s32.totalorder %s32, 1
      %s34 = scalar_select %p33, 0, %s32
      %s35 = sadd.s32 1, %s26
      %s36 = scalar_select %p33, %s35, %s26
      %p37 = scmp.ge.s32.totalorder %s36, 2
      %s38 = scalar_select %p37, 0, %s36
      %s39 = ssub.s32 %s26, %s38
      %p40 = scmp.eq.s32.totalorder %s39, 0
      %s42 = sadd.s32 %s41, 1
      %s43 = scalar_select %p40, %s41, %s42
      %p46 = pneg %p40
      %p47 = scmp.eq.s32.totalorder %s19, 1
      %p48 = por %p46, %p47
      %p49 = scmp.ne.s32.totalorder %s41, %s44
      %p50 = scmp.eq.s32.totalorder %s19, 0
      %p51 = por %p49, %p50
      %p52 = scmp.ne.s32.totalorder %s41, %s44
      %p53 = scmp.eq.s32.totalorder %s24, 1
      %p54 = por %p52, %p53
      %p55 = scmp.ne.s32.totalorder %s44, %s45
      %p56 = scmp.eq.s32.totalorder %s24, 0
      %p57 = por %p55, %p56
      %p58 = scmp.ne.s32.totalorder %s44, %s45
      %p59 = scmp.eq.s32.totalorder %s25, 1
      %p60 = por %p58, %p59
      %p62 = scmp.ne.s32.totalorder %s45, %s61
      %p63 = scmp.eq.s32.totalorder %s25, 0
      %p64 = por %p62, %p63
      %s65 = ssub.s32 %s26, %s38
      %p66 = scmp.eq.s32.totalorder %s65, 0
      %s68 = sadd.s32 %s67, 1
      %s69 = scalar_select %p66, %s67, %s68
      %p72 = pneg %p66
      %p73 = scmp.eq.s32.totalorder %s19, 1
      %p74 = por %p72, %p73
      %p75 = scmp.ne.s32.totalorder %s67, %s70
      %p76 = scmp.eq.s32.totalorder %s19, 0
      %p77 = por %p75, %p76
      %p78 = scmp.ne.s32.totalorder %s67, %s70
      %p79 = scmp.eq.s32.totalorder %s24, 1
      %p80 = por %p78, %p79
      %p81 = scmp.ne.s32.totalorder %s70, %s71
      %p82 = scmp.eq.s32.totalorder %s24, 0
      %p83 = por %p81, %p82
      %p84 = scmp.ne.s32.totalorder %s70, %s71
      %p85 = scmp.eq.s32.totalorder %s25, 1
      %p86 = por %p84, %p85
      %p88 = scmp.ne.s32.totalorder %s71, %s87
      %p89 = scmp.eq.s32.totalorder %s25, 0
      %p90 = por %p88, %p89
      %s92 = sadd.s32 %s91, 1
      %p95 = scmp.eq.s32.totalorder %s19, 1
      %p96 = scmp.ne.s32.totalorder %s91, %s93
      %p97 = scmp.eq.s32.totalorder %s19, 0
      %p98 = por %p96, %p97
      %p99 = scmp.ne.s32.totalorder %s91, %s93
      %p100 = scmp.eq.s32.totalorder %s24, 1
      %p101 = por %p99, %p100
      %p102 = scmp.ne.s32.totalorder %s93, %s94
      %p103 = scmp.eq.s32.totalorder %s24, 0
      %p104 = por %p102, %p103
      %p105 = scmp.ne.s32.totalorder %s93, %s94
      %p106 = scmp.eq.s32.totalorder %s25, 1
      %p107 = por %p105, %p106
      %p109 = scmp.ne.s32.totalorder %s94, %s108
      %p110 = scmp.eq.s32.totalorder %s25, 0
      %p111 = por %p109, %p110
      %s113 = sadd.s32 %s112, 1
      %p116 = scmp.eq.s32.totalorder %s19, 1
      %p117 = scmp.ne.s32.totalorder %s112, %s114
      %p118 = scmp.eq.s32.totalorder %s19, 0
      %p119 = por %p117, %p118
      %p120 = scmp.ne.s32.totalorder %s112, %s114
      %p121 = scmp.eq.s32.totalorder %s24, 1
      %p122 = por %p120, %p121
      %p123 = scmp.ne.s32.totalorder %s114, %s115
      %p124 = scmp.eq.s32.totalorder %s24, 0
      %p125 = por %p123, %p124
      %p126 = scmp.ne.s32.totalorder %s114, %s115
      %p127 = scmp.eq.s32.totalorder %s25, 1
      %p128 = por %p126, %p127
      %p130 = scmp.ne.s32.totalorder %s115, %s129
      %p131 = scmp.eq.s32.totalorder %s25, 0
      %p132 = por %p130, %p131
      %s134 = sadd.s32 %s133, 1
      %p137 = scmp.eq.s32.totalorder %s19, 1
      %p138 = scmp.ne.s32.totalorder %s133, %s135
      %p139 = scmp.eq.s32.totalorder %s19, 0
      %p140 = por %p138, %p139
      %p141 = scmp.ne.s32.totalorder %s133, %s135
      %p142 = scmp.eq.s32.totalorder %s24, 1
      %p143 = por %p141, %p142
      %p144 = scmp.ne.s32.totalorder %s135, %s136
      %p145 = scmp.eq.s32.totalorder %s24, 0
      %p146 = por %p144, %p145
      %p147 = scmp.ne.s32.totalorder %s135, %s136
      %p148 = scmp.eq.s32.totalorder %s25, 1
      %p149 = por %p147, %p148
      %p151 = scmp.ne.s32.totalorder %s136, %s150
      %p152 = scmp.eq.s32.totalorder %s25, 0
      %p153 = por %p151, %p152
      %s155 = sadd.s32 %s154, 1
      %p158 = scmp.eq.s32.totalorder %s19, 1
      %p159 = scmp.ne.s32.totalorder %s154, %s156
      %p160 = scmp.eq.s32.totalorder %s19, 0
      %p161 = por %p159, %p160
      %p162 = scmp.ne.s32.totalorder %s154, %s156
      %p163 = scmp.eq.s32.totalorder %s24, 1
      %p164 = por %p162, %p163
      %p165 = scmp.ne.s32.totalorder %s156, %s157
      %p166 = scmp.eq.s32.totalorder %s24, 0
      %p167 = por %p165, %p166
      %p168 = scmp.ne.s32.totalorder %s156, %s157
      %p169 = scmp.eq.s32.totalorder %s25, 1
      %p170 = por %p168, %p169
      %p172 = scmp.ne.s32.totalorder %s157, %s171
      %p173 = scmp.eq.s32.totalorder %s25, 0
      %p174 = por %p172, %p173
      %s176 = sadd.s32 %s175, 1
      %p179 = scmp.eq.s32.totalorder %s19, 1
      %p180 = scmp.ne.s32.totalorder %s175, %s177
      %p181 = scmp.eq.s32.totalorder %s19, 0
      %p182 = por %p180, %p181
      %p183 = scmp.ne.s32.totalorder %s175, %s177
      %p184 = scmp.eq.s32.totalorder %s24, 1
      %p185 = por %p183, %p184
      %p186 = scmp.ne.s32.totalorder %s177, %s178
      %p187 = scmp.eq.s32.totalorder %s24, 0
      %p188 = por %p186, %p187
      %p189 = scmp.ne.s32.totalorder %s177, %s178
      %p190 = scmp.eq.s32.totalorder %s25, 1
      %p191 = por %p189, %p190
      %p193 = scmp.ne.s32.totalorder %s178, %s192
      %p194 = scmp.eq.s32.totalorder %s25, 0
      %p195 = por %p193, %p194
      %s197 = sadd.s32 %s196, 1
      %p200 = scmp.eq.s32.totalorder %s19, 1
      %p201 = scmp.ne.s32.totalorder %s196, %s198
      %p202 = scmp.eq.s32.totalorder %s19, 0
      %p203 = por %p201, %p202
      %p204 = scmp.ne.s32.totalorder %s196, %s198
      %p205 = scmp.eq.s32.totalorder %s24, 1
      %p206 = por %p204, %p205
      %p207 = scmp.ne.s32.totalorder %s198, %s199
      %p208 = scmp.eq.s32.totalorder %s24, 0
      %p209 = por %p207, %p208
      %p210 = scmp.ne.s32.totalorder %s198, %s199
      %p211 = scmp.eq.s32.totalorder %s25, 1
      %p212 = por %p210, %p211
      %p214 = scmp.ne.s32.totalorder %s199, %s213
      %p215 = scmp.eq.s32.totalorder %s25, 0
      %p216 = por %p214, %p215
      %s218 = sadd.s32 %s217, 1
      %p221 = scmp.eq.s32.totalorder %s19, 1
      %p222 = scmp.ne.s32.totalorder %s217, %s219
      %p223 = scmp.eq.s32.totalorder %s19, 0
      %p224 = por %p222, %p223
      %p225 = scmp.ne.s32.totalorder %s217, %s219
      %p226 = scmp.eq.s32.totalorder %s24, 1
      %p227 = por %p225, %p226
      %p228 = scmp.ne.s32.totalorder %s219, %s220
      %p229 = scmp.eq.s32.totalorder %s24, 0
      %p230 = por %p228, %p229
      %p231 = scmp.ne.s32.totalorder %s219, %s220
      %p232 = scmp.eq.s32.totalorder %s25, 1
      %p233 = por %p231, %p232
      %p235 = scmp.ne.s32.totalorder %s220, %s234
      %p236 = scmp.eq.s32.totalorder %s25, 0
      %p237 = por %p235, %p236
      %s239 = sadd.s32 %s238, 1
      %p242 = scmp.eq.s32.totalorder %s19, 1
      %p243 = scmp.ne.s32.totalorder %s238, %s240
      %p244 = scmp.eq.s32.totalorder %s19, 0
      %p245 = por %p243, %p244
      %p246 = scmp.ne.s32.totalorder %s238, %s240
      %p247 = scmp.eq.s32.totalorder %s24, 1
      %p248 = por %p246, %p247
      %p249 = scmp.ne.s32.totalorder %s240, %s241
      %p250 = scmp.eq.s32.totalorder %s24, 0
      %p251 = por %p249, %p250
      %p252 = scmp.ne.s32.totalorder %s240, %s241
      %p253 = scmp.eq.s32.totalorder %s25, 1
      %p254 = por %p252, %p253
      %p256 = scmp.ne.s32.totalorder %s241, %s255
      %p257 = scmp.eq.s32.totalorder %s25, 0
      %p258 = por %p256, %p257
      %s259 = ssub.s32 %s26, %s38
      %s260 = ssub.s32 %s27, %s34
      %s261 = sor.u32 %s259, %s260
      %p262 = scmp.eq.s32.totalorder %s261, 0
      %s264 = sadd.s32 %s263, 1
      %s265 = scalar_select %p262, %s263, %s264
      %p268 = pneg %p262
      %p269 = scmp.eq.s32.totalorder %s19, 1
      %p270 = por %p268, %p269
      %p271 = scmp.ne.s32.totalorder %s263, %s266
      %p272 = scmp.eq.s32.totalorder %s19, 0
      %p273 = por %p271, %p272
      %p274 = scmp.ne.s32.totalorder %s263, %s266
      %p275 = scmp.eq.s32.totalorder %s24, 1
      %p276 = por %p274, %p275
      %p277 = scmp.ne.s32.totalorder %s266, %s267
      %p278 = scmp.eq.s32.totalorder %s24, 0
      %p279 = por %p277, %p278
      %p280 = scmp.ne.s32.totalorder %s266, %s267
      %p281 = scmp.eq.s32.totalorder %s25, 1
      %p282 = por %p280, %p281
      %p284 = scmp.ne.s32.totalorder %s267, %s283
      %p285 = scmp.eq.s32.totalorder %s25, 0
      %p286 = por %p284, %p285
      %p287 = scmp.le.s32.totalorder 1, %s19
      %p288 = scmp.lt.s32.totalorder %s19, 3
      %p289 = pnand %p287, %p288
      %p290 = pneg %p289
      // Predicated region
      $region9: #{tpu_custom_call.1} parent=5 // pred_check
        _
      $region10: #{tpu_custom_call.1} parent=5 // pred_check_branch
        %292 = sbr.rel (%p289) target = $region12
      $region11: #{tpu_custom_call.1} parent=5 // pred_region
        %s293 = ssub.s32 %s19, 1
        // Predicated region
        $region13: #{tpu_custom_call.1} parent=11 // pred_check
          %p294 = pneg %p104
        $region14: #{tpu_custom_call.1} parent=11 // pred_check_branch
          %296 = sbr.rel (%p294) target = $region16
        $region15: #{tpu_custom_call.1} parent=11 // pred_region
          _
        $region16: #{tpu_custom_call.1} parent=11 // pred_fallthru
          _
        // Predicated region
        $region17: #{tpu_custom_call.1} parent=11 // pred_check
          %p297 = pneg %p125
        $region18: #{tpu_custom_call.1} parent=11 // pred_check_branch
          %299 = sbr.rel (%p297) target = $region20
        $region19: #{tpu_custom_call.1} parent=11 // pred_region
          _
        $region20: #{tpu_custom_call.1} parent=11 // pred_fallthru
          _
        // Predicated region
        $region21: #{tpu_custom_call.1} parent=11 // pred_check
          %p300 = pneg %p146
        $region22: #{tpu_custom_call.1} parent=11 // pred_check_branch
          %302 = sbr.rel (%p300) target = $region24
        $region23: #{tpu_custom_call.1} parent=11 // pred_region
          _
        $region24: #{tpu_custom_call.1} parent=11 // pred_fallthru
          _
        // Predicated region
        $region25: #{tpu_custom_call.1} parent=11 // pred_check
          %p303 = pneg %p167
        $region26: #{tpu_custom_call.1} parent=11 // pred_check_branch
          %305 = sbr.rel (%p303) target = $region28
        $region27: #{tpu_custom_call.1} parent=11 // pred_region
          _
        $region28: #{tpu_custom_call.1} parent=11 // pred_fallthru
          _
        // Predicated region
        $region29: #{tpu_custom_call.1} parent=11 // pred_check
          %p306 = pneg %p188
        $region30: #{tpu_custom_call.1} parent=11 // pred_check_branch
          %308 = sbr.rel (%p306) target = $region32
        $region31: #{tpu_custom_call.1} parent=11 // pred_region
          _
        $region32: #{tpu_custom_call.1} parent=11 // pred_fallthru
          _
        // Predicated region
        $region33: #{tpu_custom_call.1} parent=11 // pred_check
          %p309 = pneg %p209
        $region34: #{tpu_custom_call.1} parent=11 // pred_check_branch
          %311 = sbr.rel (%p309) target = $region36
        $region35: #{tpu_custom_call.1} parent=11 // pred_region
          _
        $region36: #{tpu_custom_call.1} parent=11 // pred_fallthru
          _
        // Predicated region
        $region37: #{tpu_custom_call.1} parent=11 // pred_check
          %p312 = pneg %p230
        $region38: #{tpu_custom_call.1} parent=11 // pred_check_branch
          %314 = sbr.rel (%p312) target = $region40
        $region39: #{tpu_custom_call.1} parent=11 // pred_region
          _
        $region40: #{tpu_custom_call.1} parent=11 // pred_fallthru
          _
        // Predicated region
        $region41: #{tpu_custom_call.1} parent=11 // pred_check
          %p315 = pneg %p251
        $region42: #{tpu_custom_call.1} parent=11 // pred_check_branch
          %317 = sbr.rel (%p315) target = $region44
        $region43: #{tpu_custom_call.1} parent=11 // pred_region
          _
        $region44: #{tpu_custom_call.1} parent=11 // pred_fallthru
          _
      $region12: #{tpu_custom_call.1} parent=5 // pred_fallthru
        _
      %p318 = scmp.lt.s32.totalorder %s19, 2
      // Predicated region
      $region45: #{tpu_custom_call.1} parent=5 // pred_check
        %p319 = pneg %p318
      $region46: #{tpu_custom_call.1} parent=5 // pred_check_branch
        %321 = sbr.rel (%p319) target = $region48
      $region47: #{tpu_custom_call.1} parent=5 // pred_region
        // Predicated region
        $region49: #{tpu_custom_call.1} parent=47 // pred_check
          %p322 = pneg %p51
        $region50: #{tpu_custom_call.1} parent=47 // pred_check_branch
          %324 = sbr.rel (%p322) target = $region52
        $region51: #{tpu_custom_call.1} parent=47 // pred_region
          %p325 = scmp.lt.s32.totalorder %s26, 1
          %s326 = scalar_select %p325, %s26, 1
          %s327 = smul.addr %s326, 8
          %s328 = scalar_lea.vmem %s0, %s327
        $region52: #{tpu_custom_call.1} parent=47 // pred_fallthru
          _
        // Predicated region
        $region53: #{tpu_custom_call.1} parent=47 // pred_check
          %p329 = pneg %p77
        $region54: #{tpu_custom_call.1} parent=47 // pred_check_branch
          %331 = sbr.rel (%p329) target = $region56
        $region55: #{tpu_custom_call.1} parent=47 // pred_region
          %p332 = scmp.lt.s32.totalorder %s26, 1
          %s333 = scalar_select %p332, %s26, 1
          %s334 = scalar_lea.vmem %s1, %s333
        $region56: #{tpu_custom_call.1} parent=47 // pred_fallthru
          _
      $region48: #{tpu_custom_call.1} parent=5 // pred_fallthru
        _
      %p335 = scmp.le.s32.totalorder 1, %s19
      %p336 = scmp.lt.s32.totalorder %s19, 3
      %p337 = pnand %p335, %p336
      %p338 = pneg %p337
      // Predicated region
      $region57: #{tpu_custom_call.1} parent=5 // pred_check
        _
      $region58: #{tpu_custom_call.1} parent=5 // pred_check_branch
        %340 = sbr.rel (%p337) target = $region60
      $region59: #{tpu_custom_call.1} parent=5 // pred_region
        %s341 = ssub.s32 %s19, 1
        %p342 = scmp.lt.s32.totalorder %s28, 1
        %s343 = scalar_select %p342, %s28, 1
        %s344 = smul.addr %s343, 8
        %s345 = scalar_lea.vmem %s0, %s344
        %p346 = pneg %p57
        %p347 = pneg %p54
        %p348 = scmp.lt.s32.totalorder %s28, 1
        %s349 = scalar_select %p348, %s28, 1
        %s350 = scalar_lea.vmem %s1, %s349
        %p351 = pneg %p83
        %p352 = pneg %p80
        %p353 = pneg %p104
        %p354 = pneg %p101
        %p355 = pneg %p125
        %p356 = pneg %p122
        %p357 = pneg %p146
        %p358 = pneg %p143
        %p359 = pneg %p167
        %p360 = pneg %p164
        %p361 = pneg %p188
        %p362 = pneg %p185
        %p363 = pneg %p209
        %p364 = pneg %p206
        %p365 = pneg %p230
        %p366 = pneg %p227
        %p367 = pneg %p251
        %p368 = pneg %p248
        %p369 = pneg %p279
        %p370 = pneg %p276
        %s371 = sand.u32 %s266, 1
        %s372 = scalar_lea.sflag [#allocation7], %s371
        %s373 = sand.u32 %s266, 1
        %s374 = smul.addr %s373, 8
        %s375 = scalar_lea.vmem [#allocation6], %s374
        %p376 = scmp.lt.s32.totalorder %s28, 1
        %s377 = scalar_select %p376, %s28, 1
        %s378 = smul.addr %s377, 8
        %s379 = scalar_lea.vmem %s0, %s378
        %p380 = scmp.lt.s32.totalorder %s28, 1
        %s381 = scalar_select %p380, %s28, 1
        %s382 = scalar_lea.vmem %s1, %s381
        %p383 = scmp.eq.s32.totalorder %s29, 0
        // Predicated region
        $region61: #{tpu_custom_call.1} parent=59 // pred_check
          %p384 = pneg %p383
        $region62: #{tpu_custom_call.1} parent=59 // pred_check_branch
          %386 = sbr.rel (%p384) target = $region64
        $region63: #{tpu_custom_call.1} parent=59 // pred_region
          %v387 = vld [vmem:[%s382] sm:$0x1]
          %v388 = vsub.f32 1.0, %v387
          %v389 = vmul.f32 %v388, -1e+12
          %vm390 = vcmask 57344
          %391 = vst.msk [vmem:[#allocation5] sm:$0x1] %vm390, %v389
          %v392 = vsel %vm390, %v387, 0.0
          %393 = vadd.xlane.f32.xlu0 %v392
          %v394 = vpop.xlane.xlu0 %393
          %v395 = vmax.f32 %v394, 1.0
          %v396 = vlog2.pop %v395
          %v397 = vmul.f32 %v396, 0.6931472
          %v398 = vmul.f32 %v397, 0.16029945
          %v399 = vmul.f32 %v398, 0.125
          %v400 = vld [vmem:[%s379] sm:$0xff]
          %v401 = vld [vmem:[%s4] sm:$0xff]
          %v402 = vld [vmem:[%s4 + $0x8] sm:$0xff]
          %v403 = vld [vmem:[%s4 + $0x10] sm:$0xff]
          %v404 = vld [vmem:[%s4 + $0x18] sm:$0xff]
          %v405 = vld [vmem:[%s4 + $0x20] sm:$0xff]
          %v406 = vld [vmem:[%s4 + $0x28] sm:$0xff]
          %v407 = vld [vmem:[%s4 + $0x30] sm:$0xff]
          %v408 = vld [vmem:[%s4 + $0x38] sm:$0xff]
          %v409 = vld [vmem:[%s5] sm:$0x3]
          %v411 = vlaneseq
          %v412 = vshrl.u32 %v411, 7
          %v413 = vsub.s32 0, %v412
          %v414 = vrot.slane %v409, %v413
          %v415 = vlaneseq
          %v416 = vshrl.u32 %v415, 7
          %v417 = vsub.s32 1, %v416
          %v418 = vrot.slane %v409, %v417
          %vm421 = vcmask 261120
          %v423 = vsel %vm421, %v400, 0
          %425 = vmatprep.subr.mxu0 %v402
          %426 = vmatpush1.msra.mxu0 %v401
          %427 = vmatprep.subr.mxu0 %v404
          %428 = vmatpush1.msra.mxu0 %v403
          %429 = vmatprep.subr.mxu0 %v406
          %430 = vmatpush1.msra.mxu0 %v405
          %431 = vmatprep.subr.mxu0 %v408
          %432 = vmatpush1.msra.mxu0 %v407
          %433 = vmatprep.subr.mxu0 0.0
          %434 = vmatpush1.msra.mxu0 0.0
          %435 = vmatprep.subr.mxu0 0.0
          %436 = vmatpush1.msra.mxu0 0.0
          %437 = vmatprep.subr.mxu0 0.0
          %438 = vmatpush1.msra.mxu0 0.0
          %439 = vmatprep.subr.mxu0 0.0
          %440 = vmatpush1.msra.mxu0 0.0
          %441 = vmatprep.subr.mxu0 0.0
          %442 = vmatpush1.msra.mxu0 0.0
          %443 = vmatprep.subr.mxu0 0.0
          %444 = vmatpush1.msra.mxu0 0.0
          %445 = vmatprep.subr.mxu0 0.0
          %446 = vmatpush1.msra.mxu0 0.0
          %447 = vmatprep.subr.mxu0 0.0
          %448 = vmatpush1.msra.mxu0 0.0
          %449 = vmatprep.subr.mxu0 0.0
          %450 = vmatpush1.msra.mxu0 0.0
          %451 = vmatprep.subr.mxu0 0.0
          %452 = vmatpush1.msra.mxu0 0.0
          %453 = vmatprep.subr.mxu0 0.0
          %454 = vmatpush1.msra.mxu0 0.0
          %455 = vmatprep.subr.mxu0 0.0
          %456 = vmatpush1.msra.mxu0 0.0
          %457 = vmatprep.subr.mxu0 0.0
          %458 = vmatpush1.msra.mxu0 0.0
          %459 = vmatprep.subr.mxu0 0.0
          %460 = vmatpush1.msra.mxu0 0.0
          %461 = vmatprep.subr.mxu0 0.0
          %462 = vmatpush1.msra.mxu0 0.0
          %463 = vmatprep.subr.mxu0 0.0
          %464 = vmatpush1.msra.mxu0 0.0
          %465 = vmatprep.subr.mxu0 0.0
          %466 = vmatpush1.msra.mxu0 0.0
          %467 = vmatprep.subr.mxu0 0.0
          %468 = vmatpush1.msra.mxu0 0.0
          %469 = vmatprep.subr.mxu0 0.0
          %470 = vmatpush1.msra.mxu0 0.0
          %471 = vmatprep.subr.mxu0 0.0
          %472 = vmatpush1.msra.mxu0 0.0
          %473 = vmatprep.subr.mxu0 0.0
          %474 = vmatpush1.msra.mxu0 0.0
          %475 = vmatprep.subr.mxu0 0.0
          %476 = vmatpush1.msra.mxu0 0.0
          %477 = vmatprep.subr.mxu0 0.0
          %478 = vmatpush1.msra.mxu0 0.0
          %479 = vmatprep.subr.mxu0 0.0
          %480 = vmatpush1.msra.mxu0 0.0
          %481 = vmatprep.subr.mxu0 0.0
          %482 = vmatpush1.msra.mxu0 0.0
          %483 = vmatprep.subr.mxu0 0.0
          %484 = vmatpush1.msra.mxu0 0.0
          %485 = vmatprep.subr.mxu0 0.0
          %486 = vmatpush1.msra.mxu0 0.0
          %487 = vmatprep.subr.mxu0 0.0
          %488 = vmatpush1.msra.mxu0 0.0
          %489 = vmatprep.mubr.f32.mxu0 0.0
          %490 = vmatmul.mubr.f32.gmra.mrb[0].mxu0 %v423
          %v491 = vpop.f32.mrb[0].mxu0
          %v492 = vadd.f32 %v414, %v491
          %v493 = vpop.f32.mrb[0].mxu0
          %v494 = vadd.f32 %v418, %v493
          %495 = vdwg.mxu0
          %v496 = vxor.u32 %v492, 2147483648
          %v497 = vxor.u32 %v494, 2147483648
          %v498 = vmul.f32 %v496, 1.442695
          %v499 = vpow.pop %v498
          %v500 = vmul.f32 %v497, 1.442695
          %v501 = vpow.pop %v500
          %v502 = vadd.f32 %v499, 1.0
          %v503 = vadd.f32 %v501, 1.0
          %v504 = vrcp.pop %v502
          %v505 = vmul.f32 1.0, %v504
          %v506 = vrcp.pop %v503
          %v507 = vmul.f32 1.0, %v506
          %v508 = vmul.f32 %v492, %v505
          %v509 = vmul.f32 %v494, %v507
          %v510 = vld [vmem:[%s6] sm:$0x3]
          %v511 = vld [vmem:[%s7] sm:$0x3]
          %512 = vst [vmem:[#allocation3] sm:$0xff] %v508
          %v513 = vlaneseq
          %v514 = vshrl.u32 %v513, 7
          %v515 = vsub.s32 1, %v514
          %v516 = vrot.slane %v510, %v515
          %v517 = vmul.f32 %v509, %v516
          %v518 = vlaneseq
          %v519 = vshrl.u32 %v518, 7
          %v520 = vsub.s32 1, %v519
          %v521 = vrot.slane %v511, %v520
          %v522 = vadd.f32 %v517, %v521
          %vm523 = vcmask 523264
          %524 = vst.msk [vmem:[#allocation2] sm:$0xff] %vm523, %v522
          %v525 = vlaneseq
          %v526 = vshrl.u32 %v525, 7
          %v527 = vsub.s32 0, %v526
          %v528 = vrot.slane %v510, %v527
          %v529 = vmul.f32 %v509, %v528
          %v530 = vlaneseq
          %v531 = vshrl.u32 %v530, 7
          %v532 = vsub.s32 0, %v531
          %v533 = vrot.slane %v511, %v532
          %v534 = vadd.f32 %v529, %v533
          %v535 = vlaneseq
          %v536 = vshrl.u32 %v535, 7
          %v537 = vsub.s32 0, %v536
          %v538 = vrot.slane %v399, %v537
          %v539 = vmul.f32 %v534, %v538
          %540 = vst.msk [vmem:[#allocation4] sm:$0xff] %vm523, %v539
        $region64: #{tpu_custom_call.1} parent=59 // pred_fallthru
          _
        %s541 = smul.u32 %s29, 8
        %s542 = scalar_lea.vmem %s379, %s541
        %v543 = vld [vmem:[%s542] sm:$0xff]
        %v544 = vld [vmem:[%s2] sm:$0xff]
        %v545 = vld [vmem:[%s2 + $0x8] sm:$0xff]
        %v546 = vld [vmem:[%s2 + $0x10] sm:$0xff]
        %v547 = vld [vmem:[%s2 + $0x18] sm:$0xff]
        %v548 = vld [vmem:[%s3] sm:$0x1]
        %v550 = vlaneseq
        %v551 = vshrl.u32 %v550, 7
        %v552 = vsub.s32 0, %v551
        %v553 = vrot.slane %v548, %v552
        %vm555 = vcmask 261120
        %v557 = vsel %vm555, %v543, 0
        %559 = vmatprep.subr.mxu0 0.0
        %560 = vmatpush1.msra.mxu0 %v544
        %561 = vmatprep.subr.mxu0 0.0
        %562 = vmatpush1.msra.mxu0 %v545
        %563 = vmatprep.subr.mxu0 0.0
        %564 = vmatpush1.msra.mxu0 %v546
        %565 = vmatprep.subr.mxu0 0.0
        %566 = vmatpush1.msra.mxu0 %v547
        %567 = vmatprep.subr.mxu0 0.0
        %568 = vmatpush1.msra.mxu0 0.0
        %569 = vmatprep.subr.mxu0 0.0
        %570 = vmatpush1.msra.mxu0 0.0
        %571 = vmatprep.subr.mxu0 0.0
        %572 = vmatpush1.msra.mxu0 0.0
        %573 = vmatprep.subr.mxu0 0.0
        %574 = vmatpush1.msra.mxu0 0.0
        %575 = vmatprep.subr.mxu0 0.0
        %576 = vmatpush1.msra.mxu0 0.0
        %577 = vmatprep.subr.mxu0 0.0
        %578 = vmatpush1.msra.mxu0 0.0
        %579 = vmatprep.subr.mxu0 0.0
        %580 = vmatpush1.msra.mxu0 0.0
        %581 = vmatprep.subr.mxu0 0.0
        %582 = vmatpush1.msra.mxu0 0.0
        %583 = vmatprep.subr.mxu0 0.0
        %584 = vmatpush1.msra.mxu0 0.0
        %585 = vmatprep.subr.mxu0 0.0
        %586 = vmatpush1.msra.mxu0 0.0
        %587 = vmatprep.subr.mxu0 0.0
        %588 = vmatpush1.msra.mxu0 0.0
        %589 = vmatprep.subr.mxu0 0.0
        %590 = vmatpush1.msra.mxu0 0.0
        %591 = vmatprep.subr.mxu0 0.0
        %592 = vmatpush1.msra.mxu0 0.0
        %593 = vmatprep.subr.mxu0 0.0
        %594 = vmatpush1.msra.mxu0 0.0
        %595 = vmatprep.subr.mxu0 0.0
        %596 = vmatpush1.msra.mxu0 0.0
        %597 = vmatprep.subr.mxu0 0.0
        %598 = vmatpush1.msra.mxu0 0.0
        %599 = vmatprep.subr.mxu0 0.0
        %600 = vmatpush1.msra.mxu0 0.0
        %601 = vmatprep.subr.mxu0 0.0
        %602 = vmatpush1.msra.mxu0 0.0
        %603 = vmatprep.subr.mxu0 0.0
        %604 = vmatpush1.msra.mxu0 0.0
        %605 = vmatprep.subr.mxu0 0.0
        %606 = vmatpush1.msra.mxu0 0.0
        %607 = vmatprep.subr.mxu0 0.0
        %608 = vmatpush1.msra.mxu0 0.0
        %609 = vmatprep.subr.mxu0 0.0
        %610 = vmatpush1.msra.mxu0 0.0
        %611 = vmatprep.subr.mxu0 0.0
        %612 = vmatpush1.msra.mxu0 0.0
        %613 = vmatprep.subr.mxu0 0.0
        %614 = vmatpush1.msra.mxu0 0.0
        %615 = vmatprep.subr.mxu0 0.0
        %616 = vmatpush1.msra.mxu0 0.0
        %617 = vmatprep.subr.mxu0 0.0
        %618 = vmatpush1.msra.mxu0 0.0
        %619 = vmatprep.subr.mxu0 0.0
        %620 = vmatpush1.msra.mxu0 0.0
        %621 = vmatprep.subr.mxu0 0.0
        %622 = vmatpush1.msra.mxu0 0.0
        %623 = vmatprep.mubr.f32.mxu0 0.0
        %624 = vmatmul.mubr.f32.gmra.mrb[0].mxu0 %v557
        %v625 = vpop.f32.mrb[0].mxu0
        %v626 = vadd.f32 %v553, %v625
        %v627 = vpop.f32.mrb[0].mxu0
        %628 = vdwg.mxu0
        %v629 = vxor.u32 %v626, 2147483648
        %v630 = vmul.f32 %v629, 1.442695
        %v631 = vpow.pop %v630
        %v632 = vadd.f32 %v631, 1.0
        %v633 = vrcp.pop %v632
        %v634 = vmul.f32 1.0, %v633
        %v635 = vmul.f32 %v626, %v634
        %s636 = scalar_lea.vmem [#allocation4], %s541
        %v637 = vld [vmem:[%s636] sm:$0xff]
        %v638 = vld [vmem:[#allocation2] sm:$0xff]
        %v639 = vld [vmem:[#allocation5] sm:$0x1]
        %v641 = vlaneseq
        %v642 = vshrl.u32 %v641, 7
        %v643 = vsub.s32 0, %v642
        %v644 = vrot.slane %v639, %v643
        %vm646 = vcmask 523264
        %v648 = vsel %vm646, %v637, 0
        %v651 = vsel %vm646, %v638, 0
        %653 = vmatprep.subr.mxu0 0.0
        %654 = vmatpush1.xpose.msra.mxu0 %v651
        %655 = vmatprep.subr.mxu0 0.0
        %656 = vmatpush1.xpose.msra.mxu0 0.0
        %657 = vmatprep.subr.mxu0 0.0
        %658 = vmatpush1.xpose.msra.mxu0 0.0
        %659 = vmatprep.subr.mxu0 0.0
        %660 = vmatpush1.xpose.msra.mxu0 0.0
        %661 = vmatprep.subr.mxu0 0.0
        %662 = vmatpush1.xpose.msra.mxu0 0.0
        %663 = vmatprep.subr.mxu0 0.0
        %664 = vmatpush1.xpose.msra.mxu0 0.0
        %665 = vmatprep.subr.mxu0 0.0
        %666 = vmatpush1.xpose.msra.mxu0 0.0
        %667 = vmatprep.subr.mxu0 0.0
        %668 = vmatpush1.xpose.msra.mxu0 0.0
        %669 = vmatprep.subr.mxu0 0.0
        %670 = vmatpush1.xpose.msra.mxu0 0.0
        %671 = vmatprep.subr.mxu0 0.0
        %672 = vmatpush1.xpose.msra.mxu0 0.0
        %673 = vmatprep.subr.mxu0 0.0
        %674 = vmatpush1.xpose.msra.mxu0 0.0
        %675 = vmatprep.subr.mxu0 0.0
        %676 = vmatpush1.xpose.msra.mxu0 0.0
        %677 = vmatprep.subr.mxu0 0.0
        %678 = vmatpush1.xpose.msra.mxu0 0.0
        %679 = vmatprep.subr.mxu0 0.0
        %680 = vmatpush1.xpose.msra.mxu0 0.0
        %681 = vmatprep.subr.mxu0 0.0
        %682 = vmatpush1.xpose.msra.mxu0 0.0
        %683 = vmatprep.subr.mxu0 0.0
        %684 = vmatpush1.xpose.msra.mxu0 0.0
        %685 = vmatprep.subr.mxu0 0.0
        %686 = vmatpush1.xpose.msra.mxu0 0.0
        %687 = vmatprep.subr.mxu0 0.0
        %688 = vmatpush1.xpose.msra.mxu0 0.0
        %689 = vmatprep.subr.mxu0 0.0
        %690 = vmatpush1.xpose.msra.mxu0 0.0
        %691 = vmatprep.subr.mxu0 0.0
        %692 = vmatpush1.xpose.msra.mxu0 0.0
        %693 = vmatprep.subr.mxu0 0.0
        %694 = vmatpush1.xpose.msra.mxu0 0.0
        %695 = vmatprep.subr.mxu0 0.0
        %696 = vmatpush1.xpose.msra.mxu0 0.0
        %697 = vmatprep.subr.mxu0 0.0
        %698 = vmatpush1.xpose.msra.mxu0 0.0
        %699 = vmatprep.subr.mxu0 0.0
        %700 = vmatpush1.xpose.msra.mxu0 0.0
        %701 = vmatprep.subr.mxu0 0.0
        %702 = vmatpush1.xpose.msra.mxu0 0.0
        %703 = vmatprep.subr.mxu0 0.0
        %704 = vmatpush1.xpose.msra.mxu0 0.0
        %705 = vmatprep.subr.mxu0 0.0
        %706 = vmatpush1.xpose.msra.mxu0 0.0
        %707 = vmatprep.subr.mxu0 0.0
        %708 = vmatpush1.xpose.msra.mxu0 0.0
        %709 = vmatprep.subr.mxu0 0.0
        %710 = vmatpush1.xpose.msra.mxu0 0.0
        %711 = vmatprep.subr.mxu0 0.0
        %712 = vmatpush1.xpose.msra.mxu0 0.0
        %713 = vmatprep.subr.mxu0 0.0
        %714 = vmatpush1.xpose.msra.mxu0 0.0
        %715 = vmatprep.subr.mxu0 0.0
        %716 = vmatpush1.xpose.msra.mxu0 0.0
        %717 = vmatprep.mubr.f32.mxu0 0.0
        %718 = vmatmul.mubr.f32.gmra.mrb[0].mxu0 %v648
        %v719 = vpop.f32.mrb[0].mxu0
        %v720 = vadd.f32 %v644, %v719
        %v721 = vpop.f32.mrb[0].mxu0
        %722 = vdwg.mxu0
        %vm723 = vcmask 64512
        %v724 = vsel %vm723, %v720, -inf
        %725 = vmax.xlane.f32.xlu0 %v724
        %v726 = vpop.xlane.xlu0 %725
        %v727 = vsub.f32 %v720, %v726
        %v728 = vmul.f32 %v727, 1.442695
        %v729 = vpow.pop %v728
        %v730 = vsel %vm723, %v729, 0.0
        %731 = vadd.xlane.f32.xlu0 %v730
        %v732 = vpop.xlane.xlu0 %731
        %v733 = vrcp.pop %v732
        %v734 = vmul.f32 %v729, %v733
        %v735 = vld [vmem:[#allocation3] sm:$0xff]
        %v737 = vsel %vm723, %v734, 0
        %739 = vmatprep.subr.mxu0 0.0
        %740 = vmatpush1.msra.mxu0 %v735
        %741 = vmatprep.subr.mxu0 0.0
        %742 = vmatpush1.msra.mxu0 0.0
        %743 = vmatprep.subr.mxu0 0.0
        %744 = vmatpush1.msra.mxu0 0.0
        %745 = vmatprep.subr.mxu0 0.0
        %746 = vmatpush1.msra.mxu0 0.0
        %747 = vmatprep.subr.mxu0 0.0
        %748 = vmatpush1.msra.mxu0 0.0
        %749 = vmatprep.subr.mxu0 0.0
        %750 = vmatpush1.msra.mxu0 0.0
        %751 = vmatprep.subr.mxu0 0.0
        %752 = vmatpush1.msra.mxu0 0.0
        %753 = vmatprep.subr.mxu0 0.0
        %754 = vmatpush1.msra.mxu0 0.0
        %755 = vmatprep.subr.mxu0 0.0
        %756 = vmatpush1.msra.mxu0 0.0
        %757 = vmatprep.subr.mxu0 0.0
        %758 = vmatpush1.msra.mxu0 0.0
        %759 = vmatprep.subr.mxu0 0.0
        %760 = vmatpush1.msra.mxu0 0.0
        %761 = vmatprep.subr.mxu0 0.0
        %762 = vmatpush1.msra.mxu0 0.0
        %763 = vmatprep.subr.mxu0 0.0
        %764 = vmatpush1.msra.mxu0 0.0
        %765 = vmatprep.subr.mxu0 0.0
        %766 = vmatpush1.msra.mxu0 0.0
        %767 = vmatprep.subr.mxu0 0.0
        %768 = vmatpush1.msra.mxu0 0.0
        %769 = vmatprep.subr.mxu0 0.0
        %770 = vmatpush1.msra.mxu0 0.0
        %771 = vmatprep.subr.mxu0 0.0
        %772 = vmatpush1.msra.mxu0 0.0
        %773 = vmatprep.subr.mxu0 0.0
        %774 = vmatpush1.msra.mxu0 0.0
        %775 = vmatprep.subr.mxu0 0.0
        %776 = vmatpush1.msra.mxu0 0.0
        %777 = vmatprep.subr.mxu0 0.0
        %778 = vmatpush1.msra.mxu0 0.0
        %779 = vmatprep.subr.mxu0 0.0
        %780 = vmatpush1.msra.mxu0 0.0
        %781 = vmatprep.subr.mxu0 0.0
        %782 = vmatpush1.msra.mxu0 0.0
        %783 = vmatprep.subr.mxu0 0.0
        %784 = vmatpush1.msra.mxu0 0.0
        %785 = vmatprep.subr.mxu0 0.0
        %786 = vmatpush1.msra.mxu0 0.0
        %787 = vmatprep.subr.mxu0 0.0
        %788 = vmatpush1.msra.mxu0 0.0
        %789 = vmatprep.subr.mxu0 0.0
        %790 = vmatpush1.msra.mxu0 0.0
        %791 = vmatprep.subr.mxu0 0.0
        %792 = vmatpush1.msra.mxu0 0.0
        %793 = vmatprep.subr.mxu0 0.0
        %794 = vmatpush1.msra.mxu0 0.0
        %795 = vmatprep.subr.mxu0 0.0
        %796 = vmatpush1.msra.mxu0 0.0
        %797 = vmatprep.subr.mxu0 0.0
        %798 = vmatpush1.msra.mxu0 0.0
        %799 = vmatprep.subr.mxu0 0.0
        %800 = vmatpush1.msra.mxu0 0.0
        %801 = vmatprep.subr.mxu0 0.0
        %802 = vmatpush1.msra.mxu0 0.0
        %803 = vmatprep.mubr.f32.mxu0 0.0
        %804 = vmatmul.mubr.f32.gmra.mrb[0].mxu0 %v737
        %v805 = vpop.f32.mrb[0].mxu0
        %v806 = vadd.f32 0.0, %v805
        %v807 = vpop.f32.mrb[0].mxu0
        %808 = vdwg.mxu0
        %v809 = vmul.f32 %v635, %v806
        %v810 = vld [vmem:[%s8] sm:$0xff]
        %v811 = vld [vmem:[%s8 + $0x8] sm:$0xff]
        %v812 = vld [vmem:[%s8 + $0x10] sm:$0xff]
        %v813 = vld [vmem:[%s8 + $0x18] sm:$0xff]
        %v814 = vld [vmem:[%s8 + $0x20] sm:$0xff]
        %v815 = vld [vmem:[%s8 + $0x28] sm:$0xff]
        %v816 = vld [vmem:[%s8 + $0x30] sm:$0xff]
        %v817 = vld [vmem:[%s8 + $0x38] sm:$0xff]
        %v818 = vld [vmem:[%s8 + $0x40] sm:$0xff]
        %v819 = vld [vmem:[%s8 + $0x48] sm:$0xff]
        %v820 = vld [vmem:[%s8 + $0x50] sm:$0xff]
        %v821 = vld [vmem:[%s8 + $0x58] sm:$0xff]
        %v822 = vld [vmem:[%s8 + $0x60] sm:$0xff]
        %v823 = vld [vmem:[%s8 + $0x68] sm:$0xff]
        %v824 = vld [vmem:[%s8 + $0x70] sm:$0xff]
        %v825 = vld [vmem:[%s8 + $0x78] sm:$0xff]
        %v826 = vld [vmem:[%s9] sm:$0x1]
        %v828 = vlaneseq
        %v829 = vshrl.u32 %v828, 7
        %v830 = vsub.s32 0, %v829
        %v831 = vrot.slane %v826, %v830
        %833 = vmatprep.subr.mxu0 0.0
        %834 = vmatpush1.msra.mxu0 %v810
        %835 = vmatprep.subr.mxu0 0.0
        %836 = vmatpush1.msra.mxu0 %v811
        %837 = vmatprep.subr.mxu0 0.0
        %838 = vmatpush1.msra.mxu0 %v812
        %839 = vmatprep.subr.mxu0 0.0
        %840 = vmatpush1.msra.mxu0 %v813
        %841 = vmatprep.subr.mxu0 0.0
        %842 = vmatpush1.msra.mxu0 %v814
        %843 = vmatprep.subr.mxu0 0.0
        %844 = vmatpush1.msra.mxu0 %v815
        %845 = vmatprep.subr.mxu0 0.0
        %846 = vmatpush1.msra.mxu0 %v816
        %847 = vmatprep.subr.mxu0 0.0
        %848 = vmatpush1.msra.mxu0 %v817
        %849 = vmatprep.subr.mxu0 0.0
        %850 = vmatpush1.msra.mxu0 %v818
        %851 = vmatprep.subr.mxu0 0.0
        %852 = vmatpush1.msra.mxu0 %v819
        %853 = vmatprep.subr.mxu0 0.0
        %854 = vmatpush1.msra.mxu0 %v820
        %855 = vmatprep.subr.mxu0 0.0
        %856 = vmatpush1.msra.mxu0 %v821
        %857 = vmatprep.subr.mxu0 0.0
        %858 = vmatpush1.msra.mxu0 %v822
        %859 = vmatprep.subr.mxu0 0.0
        %860 = vmatpush1.msra.mxu0 %v823
        %861 = vmatprep.subr.mxu0 0.0
        %862 = vmatpush1.msra.mxu0 %v824
        %863 = vmatprep.subr.mxu0 0.0
        %864 = vmatpush1.msra.mxu0 %v825
        %865 = vmatprep.subr.mxu0 0.0
        %866 = vmatpush1.msra.mxu0 0.0
        %867 = vmatprep.subr.mxu0 0.0
        %868 = vmatpush1.msra.mxu0 0.0
        %869 = vmatprep.subr.mxu0 0.0
        %870 = vmatpush1.msra.mxu0 0.0
        %871 = vmatprep.subr.mxu0 0.0
        %872 = vmatpush1.msra.mxu0 0.0
        %873 = vmatprep.subr.mxu0 0.0
        %874 = vmatpush1.msra.mxu0 0.0
        %875 = vmatprep.subr.mxu0 0.0
        %876 = vmatpush1.msra.mxu0 0.0
        %877 = vmatprep.subr.mxu0 0.0
        %878 = vmatpush1.msra.mxu0 0.0
        %879 = vmatprep.subr.mxu0 0.0
        %880 = vmatpush1.msra.mxu0 0.0
        %881 = vmatprep.subr.mxu0 0.0
        %882 = vmatpush1.msra.mxu0 0.0
        %883 = vmatprep.subr.mxu0 0.0
        %884 = vmatpush1.msra.mxu0 0.0
        %885 = vmatprep.subr.mxu0 0.0
        %886 = vmatpush1.msra.mxu0 0.0
        %887 = vmatprep.subr.mxu0 0.0
        %888 = vmatpush1.msra.mxu0 0.0
        %889 = vmatprep.subr.mxu0 0.0
        %890 = vmatpush1.msra.mxu0 0.0
        %891 = vmatprep.subr.mxu0 0.0
        %892 = vmatpush1.msra.mxu0 0.0
        %893 = vmatprep.subr.mxu0 0.0
        %894 = vmatpush1.msra.mxu0 0.0
        %895 = vmatprep.subr.mxu0 0.0
        %896 = vmatpush1.msra.mxu0 0.0
        %897 = vmatprep.mubr.f32.mxu0 0.0
        %898 = vmatmul.mubr.f32.gmra.mrb[0].mxu0 %v809
        %v899 = vpop.f32.mrb[0].mxu0
        %v900 = vadd.f32 %v831, %v899
        %v901 = vpop.f32.mrb[0].mxu0
        %902 = vdwg.mxu0
        %903 = vst.msk [vmem:[%s375] sm:$0xff] %vm555, %v900
        %s904 = sand.u32 %s266, 1
        %s905 = scalar_lea.sflag [#allocation7], %s904
        %s906 = sand.u32 %s266, 1
        %s907 = smul.addr %s906, 8
        %s908 = scalar_lea.vmem [#allocation6], %s907
        // Predicated region
        $region65: #{tpu_custom_call.1} parent=59 // pred_check
          %p909 = pneg %p276
        $region66: #{tpu_custom_call.1} parent=59 // pred_check_branch
          %911 = sbr.rel (%p909) target = $region68
        $region67: #{tpu_custom_call.1} parent=59 // pred_region
          %s913 = ssub.s32 128, 128
          %914 = vsyncadd %s905, %s913
          %s915 = sadd.s32 %s29, %s28
          %s916 = smul.addr %s915, 128
          %s917 = scalar_lea.hbm %s10, %s916
          %s919 = sshll.u32 %s908, 4
          %s920 = int_to_ptr.vmem [resolvable:$true] %s919
          %922 = dma.vmem_to_hbm [thread:$0]  %s920, 128, %s917, %s905
        $region68: #{tpu_custom_call.1} parent=59 // pred_fallthru
          _
      $region60: #{tpu_custom_call.1} parent=5 // pred_fallthru
        _
      %p923 = scmp.le.s32.totalorder 2, %s19
      // Predicated region
      $region69: #{tpu_custom_call.1} parent=5 // pred_check
        %p924 = pneg %p923
      $region70: #{tpu_custom_call.1} parent=5 // pred_check_branch
        %926 = sbr.rel (%p924) target = $region72
      $region71: #{tpu_custom_call.1} parent=5 // pred_region
        %s927 = ssub.s32 %s19, 2
        // Predicated region
        $region73: #{tpu_custom_call.1} parent=71 // pred_check
          %p928 = pneg %p282
        $region74: #{tpu_custom_call.1} parent=71 // pred_check_branch
          %930 = sbr.rel (%p928) target = $region76
        $region75: #{tpu_custom_call.1} parent=71 // pred_region
          %s931 = sand.u32 %s267, 1
          %s932 = scalar_lea.sflag [#allocation7], %s931
          %s933 = sand.u32 %s267, 1
          %s934 = smul.addr %s933, 8
          %s935 = scalar_lea.vmem [#allocation6], %s934
          %936 = dma.done %s932, 128
        $region76: #{tpu_custom_call.1} parent=71 // pred_fallthru
          _
      $region72: #{tpu_custom_call.1} parent=5 // pred_fallthru
        _
    $region6: #{tpu_custom_call.1} parent=1 // loop_footer
      %s23 = sadd.s32 1, %s19
    $region7: #{tpu_custom_call.1} parent=1 // loop_footer_branch
      %18 = sbr.rel target = $region3
    $region8: #{tpu_custom_call.1} parent=1 // loop_exit
      _
    %937 = vsyncpa [#allocation7], 1
    %s938 = scalar_lea.sflag [#allocation7], 1
    %939 = vsyncpa %s938, 1

</llo_original>
